<compile_context>
chip_gen: v6e
topology: v6e:2x2x1
jax: 0.10.0
libtpu: 0.0.40
codegen_flags: <defaults>
</compile_context>

<pallas_src>
import numpy as np
import jax
import jax.numpy as jnp
from jax import lax
from jax.experimental import pallas as pl
from jax.experimental.pallas import tpu as pltpu


def _soft_bin_kernel(num_bins, dist_min, dist_max, step, coeff, normalize):
    """use_onehot=False path: gaussian soft bins + overflow channel (+ norm)."""
    last = num_bins - 1

    def kernel(d_ref, o_ref):
        d = d_ref[...].astype(jnp.float32)                         # (TM, 1)
        col = lax.broadcasted_iota(jnp.int32, (1, num_bins), 1)    # (1, NB)
        offs = dist_min + step * col.astype(jnp.float32)           # (1, NB)
        diff = d - offs                                            # (TM, NB)
        gauss = jnp.exp(coeff * diff * diff)                       # (TM, NB)
        over = (d >= dist_max).astype(jnp.float32)                 # (TM, 1)
        # Last lane carries the overflow indicator instead of a gaussian bin.
        y = jnp.where(col == last, over, gauss)                    # (TM, NB)
        if normalize:
            y = y / jnp.sum(y, axis=1, keepdims=True)
        o_ref[...] = y.astype(o_ref.dtype)

    return kernel


def _onehot_kernel(num_bins, dist_min, step):
    """use_onehot=True path: argmin over |d - offset| -> one-hot (== scatter)."""
    def kernel(d_ref, o_ref):
        d = d_ref[...].astype(jnp.float32)                         # (TM, 1)
        col = lax.broadcasted_iota(jnp.int32, (1, num_bins), 1)    # (1, NB)
        offs = dist_min + step * col.astype(jnp.float32)           # (1, NB)
        diff = jnp.abs(d - offs)                                   # (TM, NB)
        mn = jnp.min(diff, axis=1, keepdims=True)                  # (TM, 1)
        # First index attaining the minimum (matches torch.argmin tie-break).
        first = jnp.min(jnp.where(diff <= mn, col, num_bins),
                        axis=1, keepdims=True)                     # (TM, 1)
        o_ref[...] = (col == first).astype(o_ref.dtype)

    return kernel


def distance_to_bins(dist, dim, *, dist_min=0.0, dist_max=20.0, num_bins=64,
                     use_onehot=False, normalize=True, tm=512):
    """Pallas equivalent of DistanceToBins.forward. dist: (..., 1 at `dim`, ...)."""
    dim = dim % dist.ndim
    assert dist.shape[dim] == 1, dist.shape
    x = jnp.moveaxis(dist, dim, -1)            # size-1 axis move: layout no-op
    lead = x.shape[:-1]
    n = int(np.prod(lead)) if lead else 1
    x2 = x.reshape(n, 1)

    if use_onehot:
        step = (dist_max - dist_min) / (num_bins - 1)
        kernel = _onehot_kernel(num_bins, dist_min, step)
    else:
        step = (dist_max - dist_min) / (num_bins - 2)
        coeff = -0.5 / (step * 0.2) ** 2
        kernel = _soft_bin_kernel(num_bins, dist_min, dist_max, step, coeff,
                                  normalize)

    # Row tile: big enough to amortize per-step overhead, tiny next to VMEM on
    # every generation.  If N < tm, use a single full-extent block.
    tm_eff = tm if n >= tm else n
    grid = (pl.cdiv(n, tm_eff),)

    out2 = pl.pallas_call(
        kernel,
        out_shape=jax.ShapeDtypeStruct((n, num_bins), dist.dtype),
        grid_spec=pltpu.PrefetchScalarGridSpec(
            num_scalar_prefetch=0,
            grid=grid,
            in_specs=[pl.BlockSpec((tm_eff, 1), lambda i: (i, 0))],
            out_specs=pl.BlockSpec((tm_eff, num_bins), lambda i: (i, 0)),
        ),
        compiler_params=pltpu.CompilerParams(
            dimension_semantics=("parallel",)),
    )(x2)

    out = out2.reshape(*lead, num_bins)
    return jnp.moveaxis(out, -1, dim)


def distance_to_bins_ref(dist, dim, *, dist_min=0.0, dist_max=20.0, num_bins=64,
                         use_onehot=False, normalize=True):
    """Pure-JAX mirror of the PyTorch forward (offsets = dist_min + step*i,
    identical to torch.linspace up to float rounding)."""
    dim = dim % dist.ndim
    shape = [1] * dist.ndim
    shape[dim] = -1
    if use_onehot:
        step = (dist_max - dist_min) / (num_bins - 1)
        offset = dist_min + step * jnp.arange(num_bins, dtype=dist.dtype)
        diff = jnp.abs(dist - offset.reshape(shape))
        idx = jnp.argmin(diff, axis=dim, keepdims=True)
        iota = jnp.arange(num_bins).reshape(shape)
        y = (iota == idx).astype(dist.dtype)
    else:
        step = (dist_max - dist_min) / (num_bins - 2)
        offset = dist_min + step * jnp.arange(num_bins - 1, dtype=dist.dtype)
        coeff = -0.5 / (step * 0.2) ** 2
        over = (dist >= dist_max).astype(dist.dtype)
        y = jnp.exp(coeff * (dist - offset.reshape(shape)) ** 2)
        y = jnp.concatenate([y, over], axis=dim)
        if normalize:
            y = y / jnp.sum(y, axis=dim, keepdims=True)
    return y


if __name__ == "__main__":
    key = jax.random.PRNGKey(0)
    # Pairwise-distance style input: (batch=2, L=32, L=32, 1), bins along dim=-1.
    dist = 25.0 * jax.random.uniform(key, (2, 32, 32, 1), dtype=jnp.float32)

    # Default path (use_onehot=False, normalize=True).
    out = distance_to_bins(dist, dim=-1)
    out = jax.block_until_ready(out)
    assert out.shape == (2, 32, 32, 64), out.shape
    ref = distance_to_bins_ref(dist, dim=-1)
    np.testing.assert_allclose(np.asarray(out), np.asarray(ref),
                               rtol=1e-5, atol=1e-6)

    # One-hot path.
    out_oh = distance_to_bins(dist, dim=-1, use_onehot=True)
    out_oh = jax.block_until_ready(out_oh)
    ref_oh = distance_to_bins_ref(dist, dim=-1, use_onehot=True)
    np.testing.assert_array_equal(np.asarray(out_oh), np.asarray(ref_oh))

    print("KERNEL_OK")
</pallas_src>

<mosaic_0001>
module attributes {stable_mosaic.version = 11 : i64} {
  func.func @kernel(%arg0: i32, %arg1: memref<512x1xf32, #tpu.memory_space<vmem>>, %arg2: memref<512x64xf32, #tpu.memory_space<vmem>>) attributes {dimension_semantics = [#tpu.dimension_semantics<parallel>], iteration_bounds = array<i64: 4>, scalar_prefetch = 0 : i64, scratch_operands = 0 : i64, tpu.core_type = #tpu.core_type<tc>, window_params = [{transform_indices = @transform_0, window_bounds = array<i64: 512, 1>}, {transform_indices = @transform_1, window_bounds = array<i64: 512, 64>}]} {
    %c0 = arith.constant 0 : index
    %c0_0 = arith.constant 0 : index
    %0 = vector.load %arg1[%c0, %c0_0] : memref<512x1xf32, #tpu.memory_space<vmem>>, vector<512x1xf32>
    %1 = tpu.iota {dimensions = array<i32: 1>} : vector<1x64xi32>
    %2 = arith.sitofp %1 : vector<1x64xi32> to vector<1x64xf32>
    %cst = arith.constant 0.322580636 : f32
    %3 = vector.broadcast %cst : f32 to vector<1x64xf32>
    %4 = arith.mulf %3, %2 : vector<1x64xf32>
    %cst_1 = arith.constant 0.000000e+00 : f32
    %5 = vector.broadcast %cst_1 : f32 to vector<1x64xf32>
    %6 = arith.addf %5, %4 : vector<1x64xf32>
    %7 = vector.broadcast %0 : vector<512x1xf32> to vector<512x64xf32>
    %8 = vector.broadcast %6 : vector<1x64xf32> to vector<512x64xf32>
    %9 = arith.subf %7, %8 : vector<512x64xf32>
    %cst_2 = arith.constant -1.201250e+02 : f32
    %10 = vector.broadcast %cst_2 : f32 to vector<512x64xf32>
    %11 = arith.mulf %10, %9 : vector<512x64xf32>
    %12 = arith.mulf %11, %9 : vector<512x64xf32>
    %13 = math.exp %12 : vector<512x64xf32>
    %cst_3 = arith.constant 2.000000e+01 : f32
    %14 = vector.broadcast %cst_3 : f32 to vector<512x1xf32>
    %15 = arith.cmpf oge, %0, %14 : vector<512x1xf32>
    %16 = arith.extui %15 : vector<512x1xi1> to vector<512x1xi32>
    %17 = arith.sitofp %16 : vector<512x1xi32> to vector<512x1xf32>
    %c63_i32 = arith.constant 63 : i32
    %18 = vector.broadcast %c63_i32 : i32 to vector<1x64xi32>
    %19 = arith.cmpi eq, %1, %18 : vector<1x64xi32>
    %20 = vector.shape_cast %19 : vector<1x64xi1> to vector<1x64xi1>
    %21 = vector.broadcast %20 : vector<1x64xi1> to vector<512x64xi1>
    %22 = vector.shape_cast %17 : vector<512x1xf32> to vector<512x1xf32>
    %23 = vector.broadcast %22 : vector<512x1xf32> to vector<512x64xf32>
    %24 = arith.select %21, %23, %13 : vector<512x64xi1>, vector<512x64xf32>
    %cst_4 = arith.constant dense<0.000000e+00> : vector<512xf32>
    %25 = vector.multi_reduction <add>, %24, %cst_4 [1] : vector<512x64xf32> to vector<512xf32>
    %26 = vector.shape_cast %25 : vector<512xf32> to vector<512x1xf32>
    %27 = vector.broadcast %26 : vector<512x1xf32> to vector<512x64xf32>
    %28 = arith.divf %24, %27 : vector<512x64xf32>
    %c0_5 = arith.constant 0 : index
    %c0_6 = arith.constant 0 : index
    %29 = vector.load %arg2[%c0_5, %c0_6] : memref<512x64xf32, #tpu.memory_space<vmem>>, vector<512x64xf32>
    tpu.vector_store %arg2[%c0_5, %c0_6], %28 {strides = array<i32>} : memref<512x64xf32, #tpu.memory_space<vmem>>, vector<512x64xf32>,
    return
  }
  func.func @transform_0(%arg0: i32) -> (i32, i32) {
    %c0_i32 = arith.constant 0 : i32
    %c0_i32_0 = arith.constant 0 : i32
    return %arg0, %c0_i32 : i32, i32
  }
  func.func @transform_1(%arg0: i32) -> (i32, i32) {
    %c0_i32 = arith.constant 0 : i32
    %c0_i32_0 = arith.constant 0 : i32
    return %arg0, %c0_i32 : i32, i32
  }
}

</mosaic_0001>

<llo_original>
// kernel: tpu_custom_call.1
$region0: #{tpu_custom_call.1}
  #allocation0 [shape = 'u32[]', space=smem, size = 0x4, offset = 0x4, fixed_abs, tag = 'smem constant byte address 0x4 - core index']
  #allocation1 [shape = 'u32[144,128]{1,0:T(1,128)}', space=vmem, size = 0x12000, scoped, tag = 'internal scratch']
  %s0 = inlined_call_operand.vmem [shape: f32[2048,1], index: 0, kind: input, shape index: {}]
  %s1 = inlined_call_operand.vmem [shape: f32[2048,64], index: 1, kind: output, shape index: {}]
  %s2 = sld [smem:[#allocation0]]
  $region37: #{tpu_custom_call.1} parent=0
    _
  %s4 = ssub.s32 1, %s2
  %s5 = scalar_select 0, %s4, %s2
  loop: start=0, step=1, limit=6
  $region2: #{tpu_custom_call.1} parent=0 // loop_pre_header
    _
  $region3: #{tpu_custom_call.1} parent=0 // loop_header
    %s7 = sphi 0, %s11
    %p8 = scmp.ge.s32.totalorder %s7, 6
    %s17 = sphi 0, %s19
    %s20 = sphi 0, %s17
    %s21 = sphi 0, %s20
    %s37 = sphi 0, %s21
    %s43 = sphi 0, %s45
    %s46 = sphi 0, %s43
    %s47 = sphi 0, %s46
    %s63 = sphi 0, %s47
  $region4: #{tpu_custom_call.1} parent=0 // loop_header_branch
    %10 = sbr.rel (%p8) target = $region8
  $region5: #{tpu_custom_call.1} parent=0 // loop_body
    %s12 = ssub.s32 %s7, 1
    %s13 = ssub.s32 %s7, 2
    %s14 = sadd.s32 %s7, 1
    %s15 = ssub.s32 %s7, %s14
    %p16 = scmp.eq.s32.totalorder %s15, 0
    %s18 = sadd.s32 %s17, 1
    %s19 = scalar_select %p16, %s17, %s18
    %p22 = pneg %p16
    %p23 = scmp.eq.s32.totalorder %s7, 3
    %p24 = por %p22, %p23
    %p25 = scmp.ne.s32.totalorder %s17, %s20
    %p26 = scmp.eq.s32.totalorder %s7, 0
    %p27 = por %p25, %p26
    %p28 = scmp.ne.s32.totalorder %s17, %s20
    %p29 = scmp.eq.s32.totalorder %s12, 3
    %p30 = por %p28, %p29
    %p31 = scmp.ne.s32.totalorder %s20, %s21
    %p32 = scmp.eq.s32.totalorder %s12, 0
    %p33 = por %p31, %p32
    %p34 = scmp.ne.s32.totalorder %s20, %s21
    %p35 = scmp.eq.s32.totalorder %s13, 3
    %p36 = por %p34, %p35
    %p38 = scmp.ne.s32.totalorder %s21, %s37
    %p39 = scmp.eq.s32.totalorder %s13, 0
    %p40 = por %p38, %p39
    %s41 = ssub.s32 %s7, %s14
    %p42 = scmp.eq.s32.totalorder %s41, 0
    %s44 = sadd.s32 %s43, 1
    %s45 = scalar_select %p42, %s43, %s44
    %p48 = pneg %p42
    %p49 = scmp.eq.s32.totalorder %s7, 3
    %p50 = por %p48, %p49
    %p51 = scmp.ne.s32.totalorder %s43, %s46
    %p52 = scmp.eq.s32.totalorder %s7, 0
    %p53 = por %p51, %p52
    %p54 = scmp.ne.s32.totalorder %s43, %s46
    %p55 = scmp.eq.s32.totalorder %s12, 3
    %p56 = por %p54, %p55
    %p57 = scmp.ne.s32.totalorder %s46, %s47
    %p58 = scmp.eq.s32.totalorder %s12, 0
    %p59 = por %p57, %p58
    %p60 = scmp.ne.s32.totalorder %s46, %s47
    %p61 = scmp.eq.s32.totalorder %s13, 3
    %p62 = por %p60, %p61
    %p64 = scmp.ne.s32.totalorder %s47, %s63
    %p65 = scmp.eq.s32.totalorder %s13, 0
    %p66 = por %p64, %p65
    %p67 = scmp.le.s32.totalorder 1, %s7
    %p68 = scmp.lt.s32.totalorder %s7, 5
    %p69 = pnand %p67, %p68
    %p70 = pneg %p69
    // Predicated region
    $region9: #{tpu_custom_call.1} parent=5 // pred_check
      _
    $region10: #{tpu_custom_call.1} parent=5 // pred_check_branch
      %72 = sbr.rel (%p69) target = $region12
    $region11: #{tpu_custom_call.1} parent=5 // pred_region
      %s73 = ssub.s32 %s7, 1
    $region12: #{tpu_custom_call.1} parent=5 // pred_fallthru
      _
    %p74 = scmp.lt.s32.totalorder %s7, 4
    // Predicated region
    $region13: #{tpu_custom_call.1} parent=5 // pred_check
      %p75 = pneg %p74
    $region14: #{tpu_custom_call.1} parent=5 // pred_check_branch
      %77 = sbr.rel (%p75) target = $region16
    $region15: #{tpu_custom_call.1} parent=5 // pred_region
      // Predicated region
      $region17: #{tpu_custom_call.1} parent=15 // pred_check
        %p78 = pneg %p27
      $region18: #{tpu_custom_call.1} parent=15 // pred_check_branch
        %80 = sbr.rel (%p78) target = $region20
      $region19: #{tpu_custom_call.1} parent=15 // pred_region
        %s81 = smul.u32 64, %s7
        %p82 = scmp.lt.s32.totalorder %s81, 255
        %s83 = scalar_select %p82, %s81, 255
        %s84 = smul.addr %s83, 8
        %s85 = scalar_lea.vmem %s0, %s84
        %s86 = smul.u32 64, %s7
      $region20: #{tpu_custom_call.1} parent=15 // pred_fallthru
        _
    $region16: #{tpu_custom_call.1} parent=5 // pred_fallthru
      _
    %p87 = scmp.le.s32.totalorder 1, %s7
    %p88 = scmp.lt.s32.totalorder %s7, 5
    %p89 = pnand %p87, %p88
    %p90 = pneg %p89
    // Predicated region
    $region21: #{tpu_custom_call.1} parent=5 // pred_check
      _
    $region22: #{tpu_custom_call.1} parent=5 // pred_check_branch
      %92 = sbr.rel (%p89) target = $region24
    $region23: #{tpu_custom_call.1} parent=5 // pred_region
      %s93 = ssub.s32 %s7, 1
      %s94 = smul.u32 64, %s12
      %p95 = scmp.lt.s32.totalorder %s94, 255
      %s96 = scalar_select %p95, %s94, 255
      %s97 = smul.addr %s96, 8
      %s98 = scalar_lea.vmem %s0, %s97
      %p99 = pneg %p33
      %p100 = pneg %p30
      %p101 = pneg %p59
      %p102 = pneg %p56
      %s103 = smul.u32 64, %s12
      %p104 = scmp.lt.s32.totalorder %s103, 255
      %s105 = scalar_select %p104, %s103, 255
      %s106 = smul.addr %s105, 8
      %s107 = scalar_lea.vmem %s1, %s106
      %s108 = smul.u32 64, %s12
      %p109 = scmp.lt.s32.totalorder %s108, 255
      %s110 = scalar_select %p109, %s108, 255
      %s111 = smul.addr %s110, 8
      %s112 = scalar_lea.vmem %s0, %s111
      %s113 = smul.u32 64, %s12
      %s114 = smul.u32 64, %s12
      %p115 = scmp.lt.s32.totalorder %s114, 255
      %s116 = scalar_select %p115, %s114, 255
      %s117 = smul.addr %s116, 8
      %s118 = scalar_lea.vmem %s1, %s117
      %s119 = smul.u32 64, %s12
      %v120 = vld [vmem:[%s112] sm:$0xff]
      %v121 = vld [vmem:[%s112 + $0x8] sm:$0xff]
      %v122 = vld [vmem:[%s112 + $0x10] sm:$0xff]
      %v123 = vld [vmem:[%s112 + $0x18] sm:$0xff]
      %v124 = vld [vmem:[%s112 + $0x20] sm:$0xff]
      %v125 = vld [vmem:[%s112 + $0x28] sm:$0xff]
      %v126 = vld [vmem:[%s112 + $0x30] sm:$0xff]
      %v127 = vld [vmem:[%s112 + $0x38] sm:$0xff]
      %v128 = vld [vmem:[%s112 + $0x40] sm:$0xff]
      %v129 = vld [vmem:[%s112 + $0x48] sm:$0xff]
      %v130 = vld [vmem:[%s112 + $0x50] sm:$0xff]
      %v131 = vld [vmem:[%s112 + $0x58] sm:$0xff]
      %v132 = vld [vmem:[%s112 + $0x60] sm:$0xff]
      %v133 = vld [vmem:[%s112 + $0x68] sm:$0xff]
      %v134 = vld [vmem:[%s112 + $0x70] sm:$0xff]
      %v135 = vld [vmem:[%s112 + $0x78] sm:$0xff]
      %v136 = vld [vmem:[%s112 + $0x80] sm:$0xff]
      %v137 = vld [vmem:[%s112 + $0x88] sm:$0xff]
      %v138 = vld [vmem:[%s112 + $0x90] sm:$0xff]
      %v139 = vld [vmem:[%s112 + $0x98] sm:$0xff]
      %v140 = vld [vmem:[%s112 + $0xa0] sm:$0xff]
      %v141 = vld [vmem:[%s112 + $0xa8] sm:$0xff]
      %v142 = vld [vmem:[%s112 + $0xb0] sm:$0xff]
      %v143 = vld [vmem:[%s112 + $0xb8] sm:$0xff]
      %v144 = vld [vmem:[%s112 + $0xc0] sm:$0xff]
      %v145 = vld [vmem:[%s112 + $0xc8] sm:$0xff]
      %v146 = vld [vmem:[%s112 + $0xd0] sm:$0xff]
      %v147 = vld [vmem:[%s112 + $0xd8] sm:$0xff]
      %v148 = vld [vmem:[%s112 + $0xe0] sm:$0xff]
      %v149 = vld [vmem:[%s112 + $0xe8] sm:$0xff]
      %v150 = vld [vmem:[%s112 + $0xf0] sm:$0xff]
      %v151 = vld [vmem:[%s112 + $0xf8] sm:$0xff]
      %v152 = vld [vmem:[%s112 + $0x100] sm:$0xff]
      %v153 = vld [vmem:[%s112 + $0x108] sm:$0xff]
      %v154 = vld [vmem:[%s112 + $0x110] sm:$0xff]
      %v155 = vld [vmem:[%s112 + $0x118] sm:$0xff]
      %v156 = vld [vmem:[%s112 + $0x120] sm:$0xff]
      %v157 = vld [vmem:[%s112 + $0x128] sm:$0xff]
      %v158 = vld [vmem:[%s112 + $0x130] sm:$0xff]
      %v159 = vld [vmem:[%s112 + $0x138] sm:$0xff]
      %v160 = vld [vmem:[%s112 + $0x140] sm:$0xff]
      %v161 = vld [vmem:[%s112 + $0x148] sm:$0xff]
      %v162 = vld [vmem:[%s112 + $0x150] sm:$0xff]
      %v163 = vld [vmem:[%s112 + $0x158] sm:$0xff]
      %v164 = vld [vmem:[%s112 + $0x160] sm:$0xff]
      %v165 = vld [vmem:[%s112 + $0x168] sm:$0xff]
      %v166 = vld [vmem:[%s112 + $0x170] sm:$0xff]
      %v167 = vld [vmem:[%s112 + $0x178] sm:$0xff]
      %v168 = vld [vmem:[%s112 + $0x180] sm:$0xff]
      %v169 = vld [vmem:[%s112 + $0x188] sm:$0xff]
      %v170 = vld [vmem:[%s112 + $0x190] sm:$0xff]
      %v171 = vld [vmem:[%s112 + $0x198] sm:$0xff]
      %v172 = vld [vmem:[%s112 + $0x1a0] sm:$0xff]
      %v173 = vld [vmem:[%s112 + $0x1a8] sm:$0xff]
      %v174 = vld [vmem:[%s112 + $0x1b0] sm:$0xff]
      %v175 = vld [vmem:[%s112 + $0x1b8] sm:$0xff]
      %v176 = vld [vmem:[%s112 + $0x1c0] sm:$0xff]
      %v177 = vld [vmem:[%s112 + $0x1c8] sm:$0xff]
      %v178 = vld [vmem:[%s112 + $0x1d0] sm:$0xff]
      %v179 = vld [vmem:[%s112 + $0x1d8] sm:$0xff]
      %v180 = vld [vmem:[%s112 + $0x1e0] sm:$0xff]
      %v181 = vld [vmem:[%s112 + $0x1e8] sm:$0xff]
      %v182 = vld [vmem:[%s112 + $0x1f0] sm:$0xff]
      %v183 = vld [vmem:[%s112 + $0x1f8] sm:$0xff]
      %v184 = vlaneseq
      %v185 = vand.u32 %v184, 127
      %v186 = vcvt.s32.f32 %v185
      %v187 = vmul.f32 %v186, 0.32258064
      %v188 = vadd.f32 %v187, 0.0
      %190 = vset.pattern.permute.xlu0 0
      %191 = vperm.xlu0 %190, %v120
      %v192 = vpop.permute.xlu0 %191
      %195 = vset.pattern.permute.xlu0 0
      %196 = vperm.xlu0 %195, %v121
      %v197 = vpop.permute.xlu0 %196
      %200 = vset.pattern.permute.xlu0 0
      %201 = vperm.xlu0 %200, %v122
      %v202 = vpop.permute.xlu0 %201
      %205 = vset.pattern.permute.xlu0 0
      %206 = vperm.xlu0 %205, %v123
      %v207 = vpop.permute.xlu0 %206
      %210 = vset.pattern.permute.xlu0 0
      %211 = vperm.xlu0 %210, %v124
      %v212 = vpop.permute.xlu0 %211
      %215 = vset.pattern.permute.xlu0 0
      %216 = vperm.xlu0 %215, %v125
      %v217 = vpop.permute.xlu0 %216
      %220 = vset.pattern.permute.xlu0 0
      %221 = vperm.xlu0 %220, %v126
      %v222 = vpop.permute.xlu0 %221
      %225 = vset.pattern.permute.xlu0 0
      %226 = vperm.xlu0 %225, %v127
      %v227 = vpop.permute.xlu0 %226
      %230 = vset.pattern.permute.xlu0 0
      %231 = vperm.xlu0 %230, %v128
      %v232 = vpop.permute.xlu0 %231
      %235 = vset.pattern.permute.xlu0 0
      %236 = vperm.xlu0 %235, %v129
      %v237 = vpop.permute.xlu0 %236
      %240 = vset.pattern.permute.xlu0 0
      %241 = vperm.xlu0 %240, %v130
      %v242 = vpop.permute.xlu0 %241
      %245 = vset.pattern.permute.xlu0 0
      %246 = vperm.xlu0 %245, %v131
      %v247 = vpop.permute.xlu0 %246
      %250 = vset.pattern.permute.xlu0 0
      %251 = vperm.xlu0 %250, %v132
      %v252 = vpop.permute.xlu0 %251
      %255 = vset.pattern.permute.xlu0 0
      %256 = vperm.xlu0 %255, %v133
      %v257 = vpop.permute.xlu0 %256
      %260 = vset.pattern.permute.xlu0 0
      %261 = vperm.xlu0 %260, %v134
      %v262 = vpop.permute.xlu0 %261
      %265 = vset.pattern.permute.xlu0 0
      %266 = vperm.xlu0 %265, %v135
      %v267 = vpop.permute.xlu0 %266
      %270 = vset.pattern.permute.xlu0 0
      %271 = vperm.xlu0 %270, %v136
      %v272 = vpop.permute.xlu0 %271
      %275 = vset.pattern.permute.xlu0 0
      %276 = vperm.xlu0 %275, %v137
      %v277 = vpop.permute.xlu0 %276
      %280 = vset.pattern.permute.xlu0 0
      %281 = vperm.xlu0 %280, %v138
      %v282 = vpop.permute.xlu0 %281
      %285 = vset.pattern.permute.xlu0 0
      %286 = vperm.xlu0 %285, %v139
      %v287 = vpop.permute.xlu0 %286
      %290 = vset.pattern.permute.xlu0 0
      %291 = vperm.xlu0 %290, %v140
      %v292 = vpop.permute.xlu0 %291
      %295 = vset.pattern.permute.xlu0 0
      %296 = vperm.xlu0 %295, %v141
      %v297 = vpop.permute.xlu0 %296
      %300 = vset.pattern.permute.xlu0 0
      %301 = vperm.xlu0 %300, %v142
      %v302 = vpop.permute.xlu0 %301
      %305 = vset.pattern.permute.xlu0 0
      %306 = vperm.xlu0 %305, %v143
      %v307 = vpop.permute.xlu0 %306
      %310 = vset.pattern.permute.xlu0 0
      %311 = vperm.xlu0 %310, %v144
      %v312 = vpop.permute.xlu0 %311
      %315 = vset.pattern.permute.xlu0 0
      %316 = vperm.xlu0 %315, %v145
      %v317 = vpop.permute.xlu0 %316
      %320 = vset.pattern.permute.xlu0 0
      %321 = vperm.xlu0 %320, %v146
      %v322 = vpop.permute.xlu0 %321
      %325 = vset.pattern.permute.xlu0 0
      %326 = vperm.xlu0 %325, %v147
      %v327 = vpop.permute.xlu0 %326
      %330 = vset.pattern.permute.xlu0 0
      %331 = vperm.xlu0 %330, %v148
      %v332 = vpop.permute.xlu0 %331
      %335 = vset.pattern.permute.xlu0 0
      %336 = vperm.xlu0 %335, %v149
      %v337 = vpop.permute.xlu0 %336
      %340 = vset.pattern.permute.xlu0 0
      %341 = vperm.xlu0 %340, %v150
      %v342 = vpop.permute.xlu0 %341
      %345 = vset.pattern.permute.xlu0 0
      %346 = vperm.xlu0 %345, %v151
      %v347 = vpop.permute.xlu0 %346
      %350 = vset.pattern.permute.xlu0 0
      %351 = vperm.xlu0 %350, %v152
      %v352 = vpop.permute.xlu0 %351
      %355 = vset.pattern.permute.xlu0 0
      %356 = vperm.xlu0 %355, %v153
      %v357 = vpop.permute.xlu0 %356
      %360 = vset.pattern.permute.xlu0 0
      %361 = vperm.xlu0 %360, %v154
      %v362 = vpop.permute.xlu0 %361
      %365 = vset.pattern.permute.xlu0 0
      %366 = vperm.xlu0 %365, %v155
      %v367 = vpop.permute.xlu0 %366
      %370 = vset.pattern.permute.xlu0 0
      %371 = vperm.xlu0 %370, %v156
      %v372 = vpop.permute.xlu0 %371
      %375 = vset.pattern.permute.xlu0 0
      %376 = vperm.xlu0 %375, %v157
      %v377 = vpop.permute.xlu0 %376
      %380 = vset.pattern.permute.xlu0 0
      %381 = vperm.xlu0 %380, %v158
      %v382 = vpop.permute.xlu0 %381
      %385 = vset.pattern.permute.xlu0 0
      %386 = vperm.xlu0 %385, %v159
      %v387 = vpop.permute.xlu0 %386
      %390 = vset.pattern.permute.xlu0 0
      %391 = vperm.xlu0 %390, %v160
      %v392 = vpop.permute.xlu0 %391
      %395 = vset.pattern.permute.xlu0 0
      %396 = vperm.xlu0 %395, %v161
      %v397 = vpop.permute.xlu0 %396
      %400 = vset.pattern.permute.xlu0 0
      %401 = vperm.xlu0 %400, %v162
      %v402 = vpop.permute.xlu0 %401
      %405 = vset.pattern.permute.xlu0 0
      %406 = vperm.xlu0 %405, %v163
      %v407 = vpop.permute.xlu0 %406
      %410 = vset.pattern.permute.xlu0 0
      %411 = vperm.xlu0 %410, %v164
      %v412 = vpop.permute.xlu0 %411
      %415 = vset.pattern.permute.xlu0 0
      %416 = vperm.xlu0 %415, %v165
      %v417 = vpop.permute.xlu0 %416
      %420 = vset.pattern.permute.xlu0 0
      %421 = vperm.xlu0 %420, %v166
      %v422 = vpop.permute.xlu0 %421
      %425 = vset.pattern.permute.xlu0 0
      %426 = vperm.xlu0 %425, %v167
      %v427 = vpop.permute.xlu0 %426
      %430 = vset.pattern.permute.xlu0 0
      %431 = vperm.xlu0 %430, %v168
      %v432 = vpop.permute.xlu0 %431
      %435 = vset.pattern.permute.xlu0 0
      %436 = vperm.xlu0 %435, %v169
      %v437 = vpop.permute.xlu0 %436
      %440 = vset.pattern.permute.xlu0 0
      %441 = vperm.xlu0 %440, %v170
      %v442 = vpop.permute.xlu0 %441
      %445 = vset.pattern.permute.xlu0 0
      %446 = vperm.xlu0 %445, %v171
      %v447 = vpop.permute.xlu0 %446
      %450 = vset.pattern.permute.xlu0 0
      %451 = vperm.xlu0 %450, %v172
      %v452 = vpop.permute.xlu0 %451
      %455 = vset.pattern.permute.xlu0 0
      %456 = vperm.xlu0 %455, %v173
      %v457 = vpop.permute.xlu0 %456
      %460 = vset.pattern.permute.xlu0 0
      %461 = vperm.xlu0 %460, %v174
      %v462 = vpop.permute.xlu0 %461
      %465 = vset.pattern.permute.xlu0 0
      %466 = vperm.xlu0 %465, %v175
      %v467 = vpop.permute.xlu0 %466
      %470 = vset.pattern.permute.xlu0 0
      %471 = vperm.xlu0 %470, %v176
      %v472 = vpop.permute.xlu0 %471
      %475 = vset.pattern.permute.xlu0 0
      %476 = vperm.xlu0 %475, %v177
      %v477 = vpop.permute.xlu0 %476
      %480 = vset.pattern.permute.xlu0 0
      %481 = vperm.xlu0 %480, %v178
      %v482 = vpop.permute.xlu0 %481
      %485 = vset.pattern.permute.xlu0 0
      %486 = vperm.xlu0 %485, %v179
      %v487 = vpop.permute.xlu0 %486
      %490 = vset.pattern.permute.xlu0 0
      %491 = vperm.xlu0 %490, %v180
      %v492 = vpop.permute.xlu0 %491
      %495 = vset.pattern.permute.xlu0 0
      %496 = vperm.xlu0 %495, %v181
      %v497 = vpop.permute.xlu0 %496
      %500 = vset.pattern.permute.xlu0 0
      %501 = vperm.xlu0 %500, %v182
      %v502 = vpop.permute.xlu0 %501
      %505 = vset.pattern.permute.xlu0 0
      %506 = vperm.xlu0 %505, %v183
      %v507 = vpop.permute.xlu0 %506
      %v509 = vsub.f32 %v192, %v188
      %v510 = vsub.f32 %v197, %v188
      %v511 = vsub.f32 %v202, %v188
      %v512 = vsub.f32 %v207, %v188
      %v513 = vsub.f32 %v212, %v188
      %v514 = vsub.f32 %v217, %v188
      %v515 = vsub.f32 %v222, %v188
      %v516 = vsub.f32 %v227, %v188
      %v517 = vsub.f32 %v232, %v188
      %v518 = vsub.f32 %v237, %v188
      %v519 = vsub.f32 %v242, %v188
      %v520 = vsub.f32 %v247, %v188
      %v521 = vsub.f32 %v252, %v188
      %v522 = vsub.f32 %v257, %v188
      %v523 = vsub.f32 %v262, %v188
      %v524 = vsub.f32 %v267, %v188
      %v525 = vsub.f32 %v272, %v188
      %v526 = vsub.f32 %v277, %v188
      %v527 = vsub.f32 %v282, %v188
      %v528 = vsub.f32 %v287, %v188
      %v529 = vsub.f32 %v292, %v188
      %v530 = vsub.f32 %v297, %v188
      %v531 = vsub.f32 %v302, %v188
      %v532 = vsub.f32 %v307, %v188
      %v533 = vsub.f32 %v312, %v188
      %v534 = vsub.f32 %v317, %v188
      %v535 = vsub.f32 %v322, %v188
      %v536 = vsub.f32 %v327, %v188
      %v537 = vsub.f32 %v332, %v188
      %v538 = vsub.f32 %v337, %v188
      %v539 = vsub.f32 %v342, %v188
      %v540 = vsub.f32 %v347, %v188
      %v541 = vsub.f32 %v352, %v188
      %v542 = vsub.f32 %v357, %v188
      %v543 = vsub.f32 %v362, %v188
      %v544 = vsub.f32 %v367, %v188
      %v545 = vsub.f32 %v372, %v188
      %v546 = vsub.f32 %v377, %v188
      %v547 = vsub.f32 %v382, %v188
      %v548 = vsub.f32 %v387, %v188
      %v549 = vsub.f32 %v392, %v188
      %v550 = vsub.f32 %v397, %v188
      %v551 = vsub.f32 %v402, %v188
      %v552 = vsub.f32 %v407, %v188
      %v553 = vsub.f32 %v412, %v188
      %v554 = vsub.f32 %v417, %v188
      %v555 = vsub.f32 %v422, %v188
      %v556 = vsub.f32 %v427, %v188
      %v557 = vsub.f32 %v432, %v188
      %v558 = vsub.f32 %v437, %v188
      %v559 = vsub.f32 %v442, %v188
      %v560 = vsub.f32 %v447, %v188
      %v561 = vsub.f32 %v452, %v188
      %v562 = vsub.f32 %v457, %v188
      %v563 = vsub.f32 %v462, %v188
      %v564 = vsub.f32 %v467, %v188
      %v565 = vsub.f32 %v472, %v188
      %v566 = vsub.f32 %v477, %v188
      %v567 = vsub.f32 %v482, %v188
      %v568 = vsub.f32 %v487, %v188
      %v569 = vsub.f32 %v492, %v188
      %v570 = vsub.f32 %v497, %v188
      %v571 = vsub.f32 %v502, %v188
      %v572 = vsub.f32 %v507, %v188
      %v573 = vmul.f32 %v509, -120.125
      %v574 = vmul.f32 %v510, -120.125
      %v575 = vmul.f32 %v511, -120.125
      %v576 = vmul.f32 %v512, -120.125
      %v577 = vmul.f32 %v513, -120.125
      %v578 = vmul.f32 %v514, -120.125
      %v579 = vmul.f32 %v515, -120.125
      %v580 = vmul.f32 %v516, -120.125
      %v581 = vmul.f32 %v517, -120.125
      %v582 = vmul.f32 %v518, -120.125
      %v583 = vmul.f32 %v519, -120.125
      %v584 = vmul.f32 %v520, -120.125
      %v585 = vmul.f32 %v521, -120.125
      %v586 = vmul.f32 %v522, -120.125
      %v587 = vmul.f32 %v523, -120.125
      %v588 = vmul.f32 %v524, -120.125
      %v589 = vmul.f32 %v525, -120.125
      %v590 = vmul.f32 %v526, -120.125
      %v591 = vmul.f32 %v527, -120.125
      %v592 = vmul.f32 %v528, -120.125
      %v593 = vmul.f32 %v529, -120.125
      %v594 = vmul.f32 %v530, -120.125
      %v595 = vmul.f32 %v531, -120.125
      %v596 = vmul.f32 %v532, -120.125
      %v597 = vmul.f32 %v533, -120.125
      %v598 = vmul.f32 %v534, -120.125
      %v599 = vmul.f32 %v535, -120.125
      %v600 = vmul.f32 %v536, -120.125
      %v601 = vmul.f32 %v537, -120.125
      %v602 = vmul.f32 %v538, -120.125
      %v603 = vmul.f32 %v539, -120.125
      %v604 = vmul.f32 %v540, -120.125
      %v605 = vmul.f32 %v541, -120.125
      %v606 = vmul.f32 %v542, -120.125
      %v607 = vmul.f32 %v543, -120.125
      %v608 = vmul.f32 %v544, -120.125
      %v609 = vmul.f32 %v545, -120.125
      %v610 = vmul.f32 %v546, -120.125
      %v611 = vmul.f32 %v547, -120.125
      %v612 = vmul.f32 %v548, -120.125
      %v613 = vmul.f32 %v549, -120.125
      %v614 = vmul.f32 %v550, -120.125
      %v615 = vmul.f32 %v551, -120.125
      %v616 = vmul.f32 %v552, -120.125
      %v617 = vmul.f32 %v553, -120.125
      %v618 = vmul.f32 %v554, -120.125
      %v619 = vmul.f32 %v555, -120.125
      %v620 = vmul.f32 %v556, -120.125
      %v621 = vmul.f32 %v557, -120.125
      %v622 = vmul.f32 %v558, -120.125
      %v623 = vmul.f32 %v559, -120.125
      %v624 = vmul.f32 %v560, -120.125
      %v625 = vmul.f32 %v561, -120.125
      %v626 = vmul.f32 %v562, -120.125
      %v627 = vmul.f32 %v563, -120.125
      %v628 = vmul.f32 %v564, -120.125
      %v629 = vmul.f32 %v565, -120.125
      %v630 = vmul.f32 %v566, -120.125
      %v631 = vmul.f32 %v567, -120.125
      %v632 = vmul.f32 %v568, -120.125
      %v633 = vmul.f32 %v569, -120.125
      %v634 = vmul.f32 %v570, -120.125
      %v635 = vmul.f32 %v571, -120.125
      %v636 = vmul.f32 %v572, -120.125
      %v637 = vmul.f32 %v573, %v509
      %v638 = vmul.f32 %v574, %v510
      %v639 = vmul.f32 %v575, %v511
      %v640 = vmul.f32 %v576, %v512
      %v641 = vmul.f32 %v577, %v513
      %v642 = vmul.f32 %v578, %v514
      %v643 = vmul.f32 %v579, %v515
      %v644 = vmul.f32 %v580, %v516
      %v645 = vmul.f32 %v581, %v517
      %v646 = vmul.f32 %v582, %v518
      %v647 = vmul.f32 %v583, %v519
      %v648 = vmul.f32 %v584, %v520
      %v649 = vmul.f32 %v585, %v521
      %v650 = vmul.f32 %v586, %v522
      %v651 = vmul.f32 %v587, %v523
      %v652 = vmul.f32 %v588, %v524
      %v653 = vmul.f32 %v589, %v525
      %v654 = vmul.f32 %v590, %v526
      %v655 = vmul.f32 %v591, %v527
      %v656 = vmul.f32 %v592, %v528
      %v657 = vmul.f32 %v593, %v529
      %v658 = vmul.f32 %v594, %v530
      %v659 = vmul.f32 %v595, %v531
      %v660 = vmul.f32 %v596, %v532
      %v661 = vmul.f32 %v597, %v533
      %v662 = vmul.f32 %v598, %v534
      %v663 = vmul.f32 %v599, %v535
      %v664 = vmul.f32 %v600, %v536
      %v665 = vmul.f32 %v601, %v537
      %v666 = vmul.f32 %v602, %v538
      %v667 = vmul.f32 %v603, %v539
      %v668 = vmul.f32 %v604, %v540
      %v669 = vmul.f32 %v605, %v541
      %v670 = vmul.f32 %v606, %v542
      %v671 = vmul.f32 %v607, %v543
      %v672 = vmul.f32 %v608, %v544
      %v673 = vmul.f32 %v609, %v545
      %v674 = vmul.f32 %v610, %v546
      %v675 = vmul.f32 %v611, %v547
      %v676 = vmul.f32 %v612, %v548
      %v677 = vmul.f32 %v613, %v549
      %v678 = vmul.f32 %v614, %v550
      %v679 = vmul.f32 %v615, %v551
      %v680 = vmul.f32 %v616, %v552
      %v681 = vmul.f32 %v617, %v553
      %v682 = vmul.f32 %v618, %v554
      %v683 = vmul.f32 %v619, %v555
      %v684 = vmul.f32 %v620, %v556
      %v685 = vmul.f32 %v621, %v557
      %v686 = vmul.f32 %v622, %v558
      %v687 = vmul.f32 %v623, %v559
      %v688 = vmul.f32 %v624, %v560
      %v689 = vmul.f32 %v625, %v561
      %v690 = vmul.f32 %v626, %v562
      %v691 = vmul.f32 %v627, %v563
      %v692 = vmul.f32 %v628, %v564
      %v693 = vmul.f32 %v629, %v565
      %v694 = vmul.f32 %v630, %v566
      %v695 = vmul.f32 %v631, %v567
      %v696 = vmul.f32 %v632, %v568
      %v697 = vmul.f32 %v633, %v569
      %v698 = vmul.f32 %v634, %v570
      %v699 = vmul.f32 %v635, %v571
      %v700 = vmul.f32 %v636, %v572
      %v701 = vmul.f32 %v637, 1.442695
      %v702 = vpow.pop %v701
      %v703 = vmul.f32 %v638, 1.442695
      %v704 = vpow.pop %v703
      %v705 = vmul.f32 %v639, 1.442695
      %v706 = vpow.pop %v705
      %v707 = vmul.f32 %v640, 1.442695
      %v708 = vpow.pop %v707
      %v709 = vmul.f32 %v641, 1.442695
      %v710 = vpow.pop %v709
      %v711 = vmul.f32 %v642, 1.442695
      %v712 = vpow.pop %v711
      %v713 = vmul.f32 %v643, 1.442695
      %v714 = vpow.pop %v713
      %v715 = vmul.f32 %v644, 1.442695
      %v716 = vpow.pop %v715
      %v717 = vmul.f32 %v645, 1.442695
      %v718 = vpow.pop %v717
      %v719 = vmul.f32 %v646, 1.442695
      %v720 = vpow.pop %v719
      %v721 = vmul.f32 %v647, 1.442695
      %v722 = vpow.pop %v721
      %v723 = vmul.f32 %v648, 1.442695
      %v724 = vpow.pop %v723
      %v725 = vmul.f32 %v649, 1.442695
      %v726 = vpow.pop %v725
      %v727 = vmul.f32 %v650, 1.442695
      %v728 = vpow.pop %v727
      %v729 = vmul.f32 %v651, 1.442695
      %v730 = vpow.pop %v729
      %v731 = vmul.f32 %v652, 1.442695
      %v732 = vpow.pop %v731
      %v733 = vmul.f32 %v653, 1.442695
      %v734 = vpow.pop %v733
      %v735 = vmul.f32 %v654, 1.442695
      %v736 = vpow.pop %v735
      %v737 = vmul.f32 %v655, 1.442695
      %v738 = vpow.pop %v737
      %v739 = vmul.f32 %v656, 1.442695
      %v740 = vpow.pop %v739
      %v741 = vmul.f32 %v657, 1.442695
      %v742 = vpow.pop %v741
      %v743 = vmul.f32 %v658, 1.442695
      %v744 = vpow.pop %v743
      %v745 = vmul.f32 %v659, 1.442695
      %v746 = vpow.pop %v745
      %v747 = vmul.f32 %v660, 1.442695
      %v748 = vpow.pop %v747
      %v749 = vmul.f32 %v661, 1.442695
      %v750 = vpow.pop %v749
      %v751 = vmul.f32 %v662, 1.442695
      %v752 = vpow.pop %v751
      %v753 = vmul.f32 %v663, 1.442695
      %v754 = vpow.pop %v753
      %v755 = vmul.f32 %v664, 1.442695
      %v756 = vpow.pop %v755
      %v757 = vmul.f32 %v665, 1.442695
      %v758 = vpow.pop %v757
      %v759 = vmul.f32 %v666, 1.442695
      %v760 = vpow.pop %v759
      %v761 = vmul.f32 %v667, 1.442695
      %v762 = vpow.pop %v761
      %v763 = vmul.f32 %v668, 1.442695
      %v764 = vpow.pop %v763
      %v765 = vmul.f32 %v669, 1.442695
      %v766 = vpow.pop %v765
      %v767 = vmul.f32 %v670, 1.442695
      %v768 = vpow.pop %v767
      %v769 = vmul.f32 %v671, 1.442695
      %v770 = vpow.pop %v769
      %v771 = vmul.f32 %v672, 1.442695
      %v772 = vpow.pop %v771
      %v773 = vmul.f32 %v673, 1.442695
      %v774 = vpow.pop %v773
      %v775 = vmul.f32 %v674, 1.442695
      %v776 = vpow.pop %v775
      %v777 = vmul.f32 %v675, 1.442695
      %v778 = vpow.pop %v777
      %v779 = vmul.f32 %v676, 1.442695
      %v780 = vpow.pop %v779
      %v781 = vmul.f32 %v677, 1.442695
      %v782 = vpow.pop %v781
      %v783 = vmul.f32 %v678, 1.442695
      %v784 = vpow.pop %v783
      %v785 = vmul.f32 %v679, 1.442695
      %v786 = vpow.pop %v785
      %v787 = vmul.f32 %v680, 1.442695
      %v788 = vpow.pop %v787
      %v789 = vmul.f32 %v681, 1.442695
      %v790 = vpow.pop %v789
      %v791 = vmul.f32 %v682, 1.442695
      %v792 = vpow.pop %v791
      %v793 = vmul.f32 %v683, 1.442695
      %v794 = vpow.pop %v793
      %v795 = vmul.f32 %v684, 1.442695
      %v796 = vpow.pop %v795
      %v797 = vmul.f32 %v685, 1.442695
      %v798 = vpow.pop %v797
      %v799 = vmul.f32 %v686, 1.442695
      %v800 = vpow.pop %v799
      %v801 = vmul.f32 %v687, 1.442695
      %v802 = vpow.pop %v801
      %v803 = vmul.f32 %v688, 1.442695
      %v804 = vpow.pop %v803
      %v805 = vmul.f32 %v689, 1.442695
      %v806 = vpow.pop %v805
      %v807 = vmul.f32 %v690, 1.442695
      %v808 = vpow.pop %v807
      %v809 = vmul.f32 %v691, 1.442695
      %v810 = vpow.pop %v809
      %v811 = vmul.f32 %v692, 1.442695
      %v812 = vpow.pop %v811
      %v813 = vmul.f32 %v693, 1.442695
      %v814 = vpow.pop %v813
      %v815 = vmul.f32 %v694, 1.442695
      %v816 = vpow.pop %v815
      %v817 = vmul.f32 %v695, 1.442695
      %v818 = vpow.pop %v817
      %v819 = vmul.f32 %v696, 1.442695
      %v820 = vpow.pop %v819
      %v821 = vmul.f32 %v697, 1.442695
      %v822 = vpow.pop %v821
      %v823 = vmul.f32 %v698, 1.442695
      %v824 = vpow.pop %v823
      %v825 = vmul.f32 %v699, 1.442695
      %v826 = vpow.pop %v825
      %v827 = vmul.f32 %v700, 1.442695
      %v828 = vpow.pop %v827
      %vm829 = vcmp.ge.f32.partialorder %v120, 20.0
      %vm830 = vcmp.ge.f32.partialorder %v121, 20.0
      %vm831 = vcmp.ge.f32.partialorder %v122, 20.0
      %vm832 = vcmp.ge.f32.partialorder %v123, 20.0
      %vm833 = vcmp.ge.f32.partialorder %v124, 20.0
      %vm834 = vcmp.ge.f32.partialorder %v125, 20.0
      %vm835 = vcmp.ge.f32.partialorder %v126, 20.0
      %vm836 = vcmp.ge.f32.partialorder %v127, 20.0
      %vm837 = vcmp.ge.f32.partialorder %v128, 20.0
      %vm838 = vcmp.ge.f32.partialorder %v129, 20.0
      %vm839 = vcmp.ge.f32.partialorder %v130, 20.0
      %vm840 = vcmp.ge.f32.partialorder %v131, 20.0
      %vm841 = vcmp.ge.f32.partialorder %v132, 20.0
      %vm842 = vcmp.ge.f32.partialorder %v133, 20.0
      %vm843 = vcmp.ge.f32.partialorder %v134, 20.0
      %vm844 = vcmp.ge.f32.partialorder %v135, 20.0
      %vm845 = vcmp.ge.f32.partialorder %v136, 20.0
      %vm846 = vcmp.ge.f32.partialorder %v137, 20.0
      %vm847 = vcmp.ge.f32.partialorder %v138, 20.0
      %vm848 = vcmp.ge.f32.partialorder %v139, 20.0
      %vm849 = vcmp.ge.f32.partialorder %v140, 20.0
      %vm850 = vcmp.ge.f32.partialorder %v141, 20.0
      %vm851 = vcmp.ge.f32.partialorder %v142, 20.0
      %vm852 = vcmp.ge.f32.partialorder %v143, 20.0
      %vm853 = vcmp.ge.f32.partialorder %v144, 20.0
      %vm854 = vcmp.ge.f32.partialorder %v145, 20.0
      %vm855 = vcmp.ge.f32.partialorder %v146, 20.0
      %vm856 = vcmp.ge.f32.partialorder %v147, 20.0
      %vm857 = vcmp.ge.f32.partialorder %v148, 20.0
      %vm858 = vcmp.ge.f32.partialorder %v149, 20.0
      %vm859 = vcmp.ge.f32.partialorder %v150, 20.0
      %vm860 = vcmp.ge.f32.partialorder %v151, 20.0
      %vm861 = vcmp.ge.f32.partialorder %v152, 20.0
      %vm862 = vcmp.ge.f32.partialorder %v153, 20.0
      %vm863 = vcmp.ge.f32.partialorder %v154, 20.0
      %vm864 = vcmp.ge.f32.partialorder %v155, 20.0
      %vm865 = vcmp.ge.f32.partialorder %v156, 20.0
      %vm866 = vcmp.ge.f32.partialorder %v157, 20.0
      %vm867 = vcmp.ge.f32.partialorder %v158, 20.0
      %vm868 = vcmp.ge.f32.partialorder %v159, 20.0
      %vm869 = vcmp.ge.f32.partialorder %v160, 20.0
      %vm870 = vcmp.ge.f32.partialorder %v161, 20.0
      %vm871 = vcmp.ge.f32.partialorder %v162, 20.0
      %vm872 = vcmp.ge.f32.partialorder %v163, 20.0
      %vm873 = vcmp.ge.f32.partialorder %v164, 20.0
      %vm874 = vcmp.ge.f32.partialorder %v165, 20.0
      %vm875 = vcmp.ge.f32.partialorder %v166, 20.0
      %vm876 = vcmp.ge.f32.partialorder %v167, 20.0
      %vm877 = vcmp.ge.f32.partialorder %v168, 20.0
      %vm878 = vcmp.ge.f32.partialorder %v169, 20.0
      %vm879 = vcmp.ge.f32.partialorder %v170, 20.0
      %vm880 = vcmp.ge.f32.partialorder %v171, 20.0
      %vm881 = vcmp.ge.f32.partialorder %v172, 20.0
      %vm882 = vcmp.ge.f32.partialorder %v173, 20.0
      %vm883 = vcmp.ge.f32.partialorder %v174, 20.0
      %vm884 = vcmp.ge.f32.partialorder %v175, 20.0
      %vm885 = vcmp.ge.f32.partialorder %v176, 20.0
      %vm886 = vcmp.ge.f32.partialorder %v177, 20.0
      %vm887 = vcmp.ge.f32.partialorder %v178, 20.0
      %vm888 = vcmp.ge.f32.partialorder %v179, 20.0
      %vm889 = vcmp.ge.f32.partialorder %v180, 20.0
      %vm890 = vcmp.ge.f32.partialorder %v181, 20.0
      %vm891 = vcmp.ge.f32.partialorder %v182, 20.0
      %vm892 = vcmp.ge.f32.partialorder %v183, 20.0
      %v893 = vsel %vm829, 1, 0
      %v894 = vsel %vm830, 1, 0
      %v895 = vsel %vm831, 1, 0
      %v896 = vsel %vm832, 1, 0
      %v897 = vsel %vm833, 1, 0
      %v898 = vsel %vm834, 1, 0
      %v899 = vsel %vm835, 1, 0
      %v900 = vsel %vm836, 1, 0
      %v901 = vsel %vm837, 1, 0
      %v902 = vsel %vm838, 1, 0
      %v903 = vsel %vm839, 1, 0
      %v904 = vsel %vm840, 1, 0
      %v905 = vsel %vm841, 1, 0
      %v906 = vsel %vm842, 1, 0
      %v907 = vsel %vm843, 1, 0
      %v908 = vsel %vm844, 1, 0
      %v909 = vsel %vm845, 1, 0
      %v910 = vsel %vm846, 1, 0
      %v911 = vsel %vm847, 1, 0
      %v912 = vsel %vm848, 1, 0
      %v913 = vsel %vm849, 1, 0
      %v914 = vsel %vm850, 1, 0
      %v915 = vsel %vm851, 1, 0
      %v916 = vsel %vm852, 1, 0
      %v917 = vsel %vm853, 1, 0
      %v918 = vsel %vm854, 1, 0
      %v919 = vsel %vm855, 1, 0
      %v920 = vsel %vm856, 1, 0
      %v921 = vsel %vm857, 1, 0
      %v922 = vsel %vm858, 1, 0
      %v923 = vsel %vm859, 1, 0
      %v924 = vsel %vm860, 1, 0
      %v925 = vsel %vm861, 1, 0
      %v926 = vsel %vm862, 1, 0
      %v927 = vsel %vm863, 1, 0
      %v928 = vsel %vm864, 1, 0
      %v929 = vsel %vm865, 1, 0
      %v930 = vsel %vm866, 1, 0
      %v931 = vsel %vm867, 1, 0
      %v932 = vsel %vm868, 1, 0
      %v933 = vsel %vm869, 1, 0
      %v934 = vsel %vm870, 1, 0
      %v935 = vsel %vm871, 1, 0
      %v936 = vsel %vm872, 1, 0
      %v937 = vsel %vm873, 1, 0
      %v938 = vsel %vm874, 1, 0
      %v939 = vsel %vm875, 1, 0
      %v940 = vsel %vm876, 1, 0
      %v941 = vsel %vm877, 1, 0
      %v942 = vsel %vm878, 1, 0
      %v943 = vsel %vm879, 1, 0
      %v944 = vsel %vm880, 1, 0
      %v945 = vsel %vm881, 1, 0
      %v946 = vsel %vm882, 1, 0
      %v947 = vsel %vm883, 1, 0
      %v948 = vsel %vm884, 1, 0
      %v949 = vsel %vm885, 1, 0
      %v950 = vsel %vm886, 1, 0
      %v951 = vsel %vm887, 1, 0
      %v952 = vsel %vm888, 1, 0
      %v953 = vsel %vm889, 1, 0
      %v954 = vsel %vm890, 1, 0
      %v955 = vsel %vm891, 1, 0
      %v956 = vsel %vm892, 1, 0
      %v957 = vcvt.s32.f32 %v893
      %v958 = vcvt.s32.f32 %v894
      %v959 = vcvt.s32.f32 %v895
      %v960 = vcvt.s32.f32 %v896
      %v961 = vcvt.s32.f32 %v897
      %v962 = vcvt.s32.f32 %v898
      %v963 = vcvt.s32.f32 %v899
      %v964 = vcvt.s32.f32 %v900
      %v965 = vcvt.s32.f32 %v901
      %v966 = vcvt.s32.f32 %v902
      %v967 = vcvt.s32.f32 %v903
      %v968 = vcvt.s32.f32 %v904
      %v969 = vcvt.s32.f32 %v905
      %v970 = vcvt.s32.f32 %v906
      %v971 = vcvt.s32.f32 %v907
      %v972 = vcvt.s32.f32 %v908
      %v973 = vcvt.s32.f32 %v909
      %v974 = vcvt.s32.f32 %v910
      %v975 = vcvt.s32.f32 %v911
      %v976 = vcvt.s32.f32 %v912
      %v977 = vcvt.s32.f32 %v913
      %v978 = vcvt.s32.f32 %v914
      %v979 = vcvt.s32.f32 %v915
      %v980 = vcvt.s32.f32 %v916
      %v981 = vcvt.s32.f32 %v917
      %v982 = vcvt.s32.f32 %v918
      %v983 = vcvt.s32.f32 %v919
      %v984 = vcvt.s32.f32 %v920
      %v985 = vcvt.s32.f32 %v921
      %v986 = vcvt.s32.f32 %v922
      %v987 = vcvt.s32.f32 %v923
      %v988 = vcvt.s32.f32 %v924
      %v989 = vcvt.s32.f32 %v925
      %v990 = vcvt.s32.f32 %v926
      %v991 = vcvt.s32.f32 %v927
      %v992 = vcvt.s32.f32 %v928
      %v993 = vcvt.s32.f32 %v929
      %v994 = vcvt.s32.f32 %v930
      %v995 = vcvt.s32.f32 %v931
      %v996 = vcvt.s32.f32 %v932
      %v997 = vcvt.s32.f32 %v933
      %v998 = vcvt.s32.f32 %v934
      %v999 = vcvt.s32.f32 %v935
      %v1000 = vcvt.s32.f32 %v936
      %v1001 = vcvt.s32.f32 %v937
      %v1002 = vcvt.s32.f32 %v938
      %v1003 = vcvt.s32.f32 %v939
      %v1004 = vcvt.s32.f32 %v940
      %v1005 = vcvt.s32.f32 %v941
      %v1006 = vcvt.s32.f32 %v942
      %v1007 = vcvt.s32.f32 %v943
      %v1008 = vcvt.s32.f32 %v944
      %v1009 = vcvt.s32.f32 %v945
      %v1010 = vcvt.s32.f32 %v946
      %v1011 = vcvt.s32.f32 %v947
      %v1012 = vcvt.s32.f32 %v948
      %v1013 = vcvt.s32.f32 %v949
      %v1014 = vcvt.s32.f32 %v950
      %v1015 = vcvt.s32.f32 %v951
      %v1016 = vcvt.s32.f32 %v952
      %v1017 = vcvt.s32.f32 %v953
      %v1018 = vcvt.s32.f32 %v954
      %v1019 = vcvt.s32.f32 %v955
      %v1020 = vcvt.s32.f32 %v956
      %vm1021 = vcmp.eq.s32.totalorder %v185, 63
      %v1022 = vsel %vm1021, 1, 0
      %vm1023 = vcmp.eq.s32.totalorder %v1022, 1
      %1025 = vset.pattern.permute.xlu0 0
      %1026 = vperm.xlu0 %1025, %v957
      %v1027 = vpop.permute.xlu0 %1026
      %1030 = vset.pattern.permute.xlu0 0
      %1031 = vperm.xlu0 %1030, %v958
      %v1032 = vpop.permute.xlu0 %1031
      %1035 = vset.pattern.permute.xlu0 0
      %1036 = vperm.xlu0 %1035, %v959
      %v1037 = vpop.permute.xlu0 %1036
      %1040 = vset.pattern.permute.xlu0 0
      %1041 = vperm.xlu0 %1040, %v960
      %v1042 = vpop.permute.xlu0 %1041
      %1045 = vset.pattern.permute.xlu0 0
      %1046 = vperm.xlu0 %1045, %v961
      %v1047 = vpop.permute.xlu0 %1046
      %1050 = vset.pattern.permute.xlu0 0
      %1051 = vperm.xlu0 %1050, %v962
      %v1052 = vpop.permute.xlu0 %1051
      %1055 = vset.pattern.permute.xlu0 0
      %1056 = vperm.xlu0 %1055, %v963
      %v1057 = vpop.permute.xlu0 %1056
      %1060 = vset.pattern.permute.xlu0 0
      %1061 = vperm.xlu0 %1060, %v964
      %v1062 = vpop.permute.xlu0 %1061
      %1065 = vset.pattern.permute.xlu0 0
      %1066 = vperm.xlu0 %1065, %v965
      %v1067 = vpop.permute.xlu0 %1066
      %1070 = vset.pattern.permute.xlu0 0
      %1071 = vperm.xlu0 %1070, %v966
      %v1072 = vpop.permute.xlu0 %1071
      %1075 = vset.pattern.permute.xlu0 0
      %1076 = vperm.xlu0 %1075, %v967
      %v1077 = vpop.permute.xlu0 %1076
      %1080 = vset.pattern.permute.xlu0 0
      %1081 = vperm.xlu0 %1080, %v968
      %v1082 = vpop.permute.xlu0 %1081
      %1085 = vset.pattern.permute.xlu0 0
      %1086 = vperm.xlu0 %1085, %v969
      %v1087 = vpop.permute.xlu0 %1086
      %1090 = vset.pattern.permute.xlu0 0
      %1091 = vperm.xlu0 %1090, %v970
      %v1092 = vpop.permute.xlu0 %1091
      %1095 = vset.pattern.permute.xlu0 0
      %1096 = vperm.xlu0 %1095, %v971
      %v1097 = vpop.permute.xlu0 %1096
      %1100 = vset.pattern.permute.xlu0 0
      %1101 = vperm.xlu0 %1100, %v972
      %v1102 = vpop.permute.xlu0 %1101
      %1105 = vset.pattern.permute.xlu0 0
      %1106 = vperm.xlu0 %1105, %v973
      %v1107 = vpop.permute.xlu0 %1106
      %1110 = vset.pattern.permute.xlu0 0
      %1111 = vperm.xlu0 %1110, %v974
      %v1112 = vpop.permute.xlu0 %1111
      %1115 = vset.pattern.permute.xlu0 0
      %1116 = vperm.xlu0 %1115, %v975
      %v1117 = vpop.permute.xlu0 %1116
      %1120 = vset.pattern.permute.xlu0 0
      %1121 = vperm.xlu0 %1120, %v976
      %v1122 = vpop.permute.xlu0 %1121
      %1125 = vset.pattern.permute.xlu0 0
      %1126 = vperm.xlu0 %1125, %v977
      %v1127 = vpop.permute.xlu0 %1126
      %1130 = vset.pattern.permute.xlu0 0
      %1131 = vperm.xlu0 %1130, %v978
      %v1132 = vpop.permute.xlu0 %1131
      %1135 = vset.pattern.permute.xlu0 0
      %1136 = vperm.xlu0 %1135, %v979
      %v1137 = vpop.permute.xlu0 %1136
      %1140 = vset.pattern.permute.xlu0 0
      %1141 = vperm.xlu0 %1140, %v980
      %v1142 = vpop.permute.xlu0 %1141
      %1145 = vset.pattern.permute.xlu0 0
      %1146 = vperm.xlu0 %1145, %v981
      %v1147 = vpop.permute.xlu0 %1146
      %1150 = vset.pattern.permute.xlu0 0
      %1151 = vperm.xlu0 %1150, %v982
      %v1152 = vpop.permute.xlu0 %1151
      %1155 = vset.pattern.permute.xlu0 0
      %1156 = vperm.xlu0 %1155, %v983
      %v1157 = vpop.permute.xlu0 %1156
      %1160 = vset.pattern.permute.xlu0 0
      %1161 = vperm.xlu0 %1160, %v984
      %v1162 = vpop.permute.xlu0 %1161
      %1165 = vset.pattern.permute.xlu0 0
      %1166 = vperm.xlu0 %1165, %v985
      %v1167 = vpop.permute.xlu0 %1166
      %1170 = vset.pattern.permute.xlu0 0
      %1171 = vperm.xlu0 %1170, %v986
      %v1172 = vpop.permute.xlu0 %1171
      %1175 = vset.pattern.permute.xlu0 0
      %1176 = vperm.xlu0 %1175, %v987
      %v1177 = vpop.permute.xlu0 %1176
      %1180 = vset.pattern.permute.xlu0 0
      %1181 = vperm.xlu0 %1180, %v988
      %v1182 = vpop.permute.xlu0 %1181
      %1185 = vset.pattern.permute.xlu0 0
      %1186 = vperm.xlu0 %1185, %v989
      %v1187 = vpop.permute.xlu0 %1186
      %1190 = vset.pattern.permute.xlu0 0
      %1191 = vperm.xlu0 %1190, %v990
      %v1192 = vpop.permute.xlu0 %1191
      %1195 = vset.pattern.permute.xlu0 0
      %1196 = vperm.xlu0 %1195, %v991
      %v1197 = vpop.permute.xlu0 %1196
      %1200 = vset.pattern.permute.xlu0 0
      %1201 = vperm.xlu0 %1200, %v992
      %v1202 = vpop.permute.xlu0 %1201
      %1205 = vset.pattern.permute.xlu0 0
      %1206 = vperm.xlu0 %1205, %v993
      %v1207 = vpop.permute.xlu0 %1206
      %1210 = vset.pattern.permute.xlu0 0
      %1211 = vperm.xlu0 %1210, %v994
      %v1212 = vpop.permute.xlu0 %1211
      %1215 = vset.pattern.permute.xlu0 0
      %1216 = vperm.xlu0 %1215, %v995
      %v1217 = vpop.permute.xlu0 %1216
      %1220 = vset.pattern.permute.xlu0 0
      %1221 = vperm.xlu0 %1220, %v996
      %v1222 = vpop.permute.xlu0 %1221
      %1225 = vset.pattern.permute.xlu0 0
      %1226 = vperm.xlu0 %1225, %v997
      %v1227 = vpop.permute.xlu0 %1226
      %1230 = vset.pattern.permute.xlu0 0
      %1231 = vperm.xlu0 %1230, %v998
      %v1232 = vpop.permute.xlu0 %1231
      %1235 = vset.pattern.permute.xlu0 0
      %1236 = vperm.xlu0 %1235, %v999
      %v1237 = vpop.permute.xlu0 %1236
      %1240 = vset.pattern.permute.xlu0 0
      %1241 = vperm.xlu0 %1240, %v1000
      %v1242 = vpop.permute.xlu0 %1241
      %1245 = vset.pattern.permute.xlu0 0
      %1246 = vperm.xlu0 %1245, %v1001
      %v1247 = vpop.permute.xlu0 %1246
      %1250 = vset.pattern.permute.xlu0 0
      %1251 = vperm.xlu0 %1250, %v1002
      %v1252 = vpop.permute.xlu0 %1251
      %1255 = vset.pattern.permute.xlu0 0
      %1256 = vperm.xlu0 %1255, %v1003
      %v1257 = vpop.permute.xlu0 %1256
      %1260 = vset.pattern.permute.xlu0 0
      %1261 = vperm.xlu0 %1260, %v1004
      %v1262 = vpop.permute.xlu0 %1261
      %1265 = vset.pattern.permute.xlu0 0
      %1266 = vperm.xlu0 %1265, %v1005
      %v1267 = vpop.permute.xlu0 %1266
      %1270 = vset.pattern.permute.xlu0 0
      %1271 = vperm.xlu0 %1270, %v1006
      %v1272 = vpop.permute.xlu0 %1271
      %1275 = vset.pattern.permute.xlu0 0
      %1276 = vperm.xlu0 %1275, %v1007
      %v1277 = vpop.permute.xlu0 %1276
      %1280 = vset.pattern.permute.xlu0 0
      %1281 = vperm.xlu0 %1280, %v1008
      %v1282 = vpop.permute.xlu0 %1281
      %1285 = vset.pattern.permute.xlu0 0
      %1286 = vperm.xlu0 %1285, %v1009
      %v1287 = vpop.permute.xlu0 %1286
      %1290 = vset.pattern.permute.xlu0 0
      %1291 = vperm.xlu0 %1290, %v1010
      %v1292 = vpop.permute.xlu0 %1291
      %1295 = vset.pattern.permute.xlu0 0
      %1296 = vperm.xlu0 %1295, %v1011
      %v1297 = vpop.permute.xlu0 %1296
      %1300 = vset.pattern.permute.xlu0 0
      %1301 = vperm.xlu0 %1300, %v1012
      %v1302 = vpop.permute.xlu0 %1301
      %1305 = vset.pattern.permute.xlu0 0
      %1306 = vperm.xlu0 %1305, %v1013
      %v1307 = vpop.permute.xlu0 %1306
      %1310 = vset.pattern.permute.xlu0 0
      %1311 = vperm.xlu0 %1310, %v1014
      %v1312 = vpop.permute.xlu0 %1311
      %1315 = vset.pattern.permute.xlu0 0
      %1316 = vperm.xlu0 %1315, %v1015
      %v1317 = vpop.permute.xlu0 %1316
      %1320 = vset.pattern.permute.xlu0 0
      %1321 = vperm.xlu0 %1320, %v1016
      %v1322 = vpop.permute.xlu0 %1321
      %1325 = vset.pattern.permute.xlu0 0
      %1326 = vperm.xlu0 %1325, %v1017
      %v1327 = vpop.permute.xlu0 %1326
      %1330 = vset.pattern.permute.xlu0 0
      %1331 = vperm.xlu0 %1330, %v1018
      %v1332 = vpop.permute.xlu0 %1331
      %1335 = vset.pattern.permute.xlu0 0
      %1336 = vperm.xlu0 %1335, %v1019
      %v1337 = vpop.permute.xlu0 %1336
      %1340 = vset.pattern.permute.xlu0 0
      %1341 = vperm.xlu0 %1340, %v1020
      %v1342 = vpop.permute.xlu0 %1341
      %v1344 = vsel %vm1023, %v1027, %v702
      %v1345 = vsel %vm1023, %v1032, %v704
      %v1346 = vsel %vm1023, %v1037, %v706
      %v1347 = vsel %vm1023, %v1042, %v708
      %v1348 = vsel %vm1023, %v1047, %v710
      %v1349 = vsel %vm1023, %v1052, %v712
      %v1350 = vsel %vm1023, %v1057, %v714
      %v1351 = vsel %vm1023, %v1062, %v716
      %v1352 = vsel %vm1023, %v1067, %v718
      %v1353 = vsel %vm1023, %v1072, %v720
      %v1354 = vsel %vm1023, %v1077, %v722
      %v1355 = vsel %vm1023, %v1082, %v724
      %v1356 = vsel %vm1023, %v1087, %v726
      %v1357 = vsel %vm1023, %v1092, %v728
      %v1358 = vsel %vm1023, %v1097, %v730
      %v1359 = vsel %vm1023, %v1102, %v732
      %v1360 = vsel %vm1023, %v1107, %v734
      %v1361 = vsel %vm1023, %v1112, %v736
      %v1362 = vsel %vm1023, %v1117, %v738
      %v1363 = vsel %vm1023, %v1122, %v740
      %v1364 = vsel %vm1023, %v1127, %v742
      %v1365 = vsel %vm1023, %v1132, %v744
      %v1366 = vsel %vm1023, %v1137, %v746
      %v1367 = vsel %vm1023, %v1142, %v748
      %v1368 = vsel %vm1023, %v1147, %v750
      %v1369 = vsel %vm1023, %v1152, %v752
      %v1370 = vsel %vm1023, %v1157, %v754
      %v1371 = vsel %vm1023, %v1162, %v756
      %v1372 = vsel %vm1023, %v1167, %v758
      %v1373 = vsel %vm1023, %v1172, %v760
      %v1374 = vsel %vm1023, %v1177, %v762
      %v1375 = vsel %vm1023, %v1182, %v764
      %v1376 = vsel %vm1023, %v1187, %v766
      %v1377 = vsel %vm1023, %v1192, %v768
      %v1378 = vsel %vm1023, %v1197, %v770
      %v1379 = vsel %vm1023, %v1202, %v772
      %v1380 = vsel %vm1023, %v1207, %v774
      %v1381 = vsel %vm1023, %v1212, %v776
      %v1382 = vsel %vm1023, %v1217, %v778
      %v1383 = vsel %vm1023, %v1222, %v780
      %v1384 = vsel %vm1023, %v1227, %v782
      %v1385 = vsel %vm1023, %v1232, %v784
      %v1386 = vsel %vm1023, %v1237, %v786
      %v1387 = vsel %vm1023, %v1242, %v788
      %v1388 = vsel %vm1023, %v1247, %v790
      %v1389 = vsel %vm1023, %v1252, %v792
      %v1390 = vsel %vm1023, %v1257, %v794
      %v1391 = vsel %vm1023, %v1262, %v796
      %v1392 = vsel %vm1023, %v1267, %v798
      %v1393 = vsel %vm1023, %v1272, %v800
      %v1394 = vsel %vm1023, %v1277, %v802
      %v1395 = vsel %vm1023, %v1282, %v804
      %v1396 = vsel %vm1023, %v1287, %v806
      %v1397 = vsel %vm1023, %v1292, %v808
      %v1398 = vsel %vm1023, %v1297, %v810
      %v1399 = vsel %vm1023, %v1302, %v812
      %v1400 = vsel %vm1023, %v1307, %v814
      %v1401 = vsel %vm1023, %v1312, %v816
      %v1402 = vsel %vm1023, %v1317, %v818
      %v1403 = vsel %vm1023, %v1322, %v820
      %v1404 = vsel %vm1023, %v1327, %v822
      %v1405 = vsel %vm1023, %v1332, %v824
      %v1406 = vsel %vm1023, %v1337, %v826
      %v1407 = vsel %vm1023, %v1342, %v828
      %vm1408 = vcmask 523264
      %v1409 = vsel %vm1408, %v1344, 0.0
      %1410 = vadd.xlane.f32.xlu0 %v1409
      %v1411 = vpop.xlane.xlu0 %1410
      %v1412 = vsel %vm1408, %v1345, 0.0
      %1413 = vadd.xlane.f32.xlu0 %v1412
      %v1414 = vpop.xlane.xlu0 %1413
      %v1415 = vsel %vm1408, %v1346, 0.0
      %1416 = vadd.xlane.f32.xlu0 %v1415
      %v1417 = vpop.xlane.xlu0 %1416
      %v1418 = vsel %vm1408, %v1347, 0.0
      %1419 = vadd.xlane.f32.xlu0 %v1418
      %v1420 = vpop.xlane.xlu0 %1419
      %v1421 = vsel %vm1408, %v1348, 0.0
      %1422 = vadd.xlane.f32.xlu0 %v1421
      %v1423 = vpop.xlane.xlu0 %1422
      %v1424 = vsel %vm1408, %v1349, 0.0
      %1425 = vadd.xlane.f32.xlu0 %v1424
      %v1426 = vpop.xlane.xlu0 %1425
      %v1427 = vsel %vm1408, %v1350, 0.0
      %1428 = vadd.xlane.f32.xlu0 %v1427
      %v1429 = vpop.xlane.xlu0 %1428
      %v1430 = vsel %vm1408, %v1351, 0.0
      %1431 = vadd.xlane.f32.xlu0 %v1430
      %v1432 = vpop.xlane.xlu0 %1431
      %v1433 = vsel %vm1408, %v1352, 0.0
      %1434 = vadd.xlane.f32.xlu0 %v1433
      %v1435 = vpop.xlane.xlu0 %1434
      %v1436 = vsel %vm1408, %v1353, 0.0
      %1437 = vadd.xlane.f32.xlu0 %v1436
      %v1438 = vpop.xlane.xlu0 %1437
      %v1439 = vsel %vm1408, %v1354, 0.0
      %1440 = vadd.xlane.f32.xlu0 %v1439
      %v1441 = vpop.xlane.xlu0 %1440
      %v1442 = vsel %vm1408, %v1355, 0.0
      %1443 = vadd.xlane.f32.xlu0 %v1442
      %v1444 = vpop.xlane.xlu0 %1443
      %v1445 = vsel %vm1408, %v1356, 0.0
      %1446 = vadd.xlane.f32.xlu0 %v1445
      %v1447 = vpop.xlane.xlu0 %1446
      %v1448 = vsel %vm1408, %v1357, 0.0
      %1449 = vadd.xlane.f32.xlu0 %v1448
      %v1450 = vpop.xlane.xlu0 %1449
      %v1451 = vsel %vm1408, %v1358, 0.0
      %1452 = vadd.xlane.f32.xlu0 %v1451
      %v1453 = vpop.xlane.xlu0 %1452
      %v1454 = vsel %vm1408, %v1359, 0.0
      %1455 = vadd.xlane.f32.xlu0 %v1454
      %v1456 = vpop.xlane.xlu0 %1455
      %v1457 = vsel %vm1408, %v1360, 0.0
      %1458 = vadd.xlane.f32.xlu0 %v1457
      %v1459 = vpop.xlane.xlu0 %1458
      %v1460 = vsel %vm1408, %v1361, 0.0
      %1461 = vadd.xlane.f32.xlu0 %v1460
      %v1462 = vpop.xlane.xlu0 %1461
      %v1463 = vsel %vm1408, %v1362, 0.0
      %1464 = vadd.xlane.f32.xlu0 %v1463
      %v1465 = vpop.xlane.xlu0 %1464
      %v1466 = vsel %vm1408, %v1363, 0.0
      %1467 = vadd.xlane.f32.xlu0 %v1466
      %v1468 = vpop.xlane.xlu0 %1467
      %v1469 = vsel %vm1408, %v1364, 0.0
      %1470 = vadd.xlane.f32.xlu0 %v1469
      %v1471 = vpop.xlane.xlu0 %1470
      %v1472 = vsel %vm1408, %v1365, 0.0
      %1473 = vadd.xlane.f32.xlu0 %v1472
      %v1474 = vpop.xlane.xlu0 %1473
      %v1475 = vsel %vm1408, %v1366, 0.0
      %1476 = vadd.xlane.f32.xlu0 %v1475
      %v1477 = vpop.xlane.xlu0 %1476
      %v1478 = vsel %vm1408, %v1367, 0.0
      %1479 = vadd.xlane.f32.xlu0 %v1478
      %v1480 = vpop.xlane.xlu0 %1479
      %v1481 = vsel %vm1408, %v1368, 0.0
      %1482 = vadd.xlane.f32.xlu0 %v1481
      %v1483 = vpop.xlane.xlu0 %1482
      %v1484 = vsel %vm1408, %v1369, 0.0
      %1485 = vadd.xlane.f32.xlu0 %v1484
      %v1486 = vpop.xlane.xlu0 %1485
      %v1487 = vsel %vm1408, %v1370, 0.0
      %1488 = vadd.xlane.f32.xlu0 %v1487
      %v1489 = vpop.xlane.xlu0 %1488
      %v1490 = vsel %vm1408, %v1371, 0.0
      %1491 = vadd.xlane.f32.xlu0 %v1490
      %v1492 = vpop.xlane.xlu0 %1491
      %v1493 = vsel %vm1408, %v1372, 0.0
      %1494 = vadd.xlane.f32.xlu0 %v1493
      %v1495 = vpop.xlane.xlu0 %1494
      %v1496 = vsel %vm1408, %v1373, 0.0
      %1497 = vadd.xlane.f32.xlu0 %v1496
      %v1498 = vpop.xlane.xlu0 %1497
      %v1499 = vsel %vm1408, %v1374, 0.0
      %1500 = vadd.xlane.f32.xlu0 %v1499
      %v1501 = vpop.xlane.xlu0 %1500
      %v1502 = vsel %vm1408, %v1375, 0.0
      %1503 = vadd.xlane.f32.xlu0 %v1502
      %v1504 = vpop.xlane.xlu0 %1503
      %v1505 = vsel %vm1408, %v1376, 0.0
      %1506 = vadd.xlane.f32.xlu0 %v1505
      %v1507 = vpop.xlane.xlu0 %1506
      %v1508 = vsel %vm1408, %v1377, 0.0
      %1509 = vadd.xlane.f32.xlu0 %v1508
      %v1510 = vpop.xlane.xlu0 %1509
      %v1511 = vsel %vm1408, %v1378, 0.0
      %1512 = vadd.xlane.f32.xlu0 %v1511
      %v1513 = vpop.xlane.xlu0 %1512
      %v1514 = vsel %vm1408, %v1379, 0.0
      %1515 = vadd.xlane.f32.xlu0 %v1514
      %v1516 = vpop.xlane.xlu0 %1515
      %v1517 = vsel %vm1408, %v1380, 0.0
      %1518 = vadd.xlane.f32.xlu0 %v1517
      %v1519 = vpop.xlane.xlu0 %1518
      %v1520 = vsel %vm1408, %v1381, 0.0
      %1521 = vadd.xlane.f32.xlu0 %v1520
      %v1522 = vpop.xlane.xlu0 %1521
      %v1523 = vsel %vm1408, %v1382, 0.0
      %1524 = vadd.xlane.f32.xlu0 %v1523
      %v1525 = vpop.xlane.xlu0 %1524
      %v1526 = vsel %vm1408, %v1383, 0.0
      %1527 = vadd.xlane.f32.xlu0 %v1526
      %v1528 = vpop.xlane.xlu0 %1527
      %v1529 = vsel %vm1408, %v1384, 0.0
      %1530 = vadd.xlane.f32.xlu0 %v1529
      %v1531 = vpop.xlane.xlu0 %1530
      %v1532 = vsel %vm1408, %v1385, 0.0
      %1533 = vadd.xlane.f32.xlu0 %v1532
      %v1534 = vpop.xlane.xlu0 %1533
      %v1535 = vsel %vm1408, %v1386, 0.0
      %1536 = vadd.xlane.f32.xlu0 %v1535
      %v1537 = vpop.xlane.xlu0 %1536
      %v1538 = vsel %vm1408, %v1387, 0.0
      %1539 = vadd.xlane.f32.xlu0 %v1538
      %v1540 = vpop.xlane.xlu0 %1539
      %v1541 = vsel %vm1408, %v1388, 0.0
      %1542 = vadd.xlane.f32.xlu0 %v1541
      %v1543 = vpop.xlane.xlu0 %1542
      %v1544 = vsel %vm1408, %v1389, 0.0
      %1545 = vadd.xlane.f32.xlu0 %v1544
      %v1546 = vpop.xlane.xlu0 %1545
      %v1547 = vsel %vm1408, %v1390, 0.0
      %1548 = vadd.xlane.f32.xlu0 %v1547
      %v1549 = vpop.xlane.xlu0 %1548
      %v1550 = vsel %vm1408, %v1391, 0.0
      %1551 = vadd.xlane.f32.xlu0 %v1550
      %v1552 = vpop.xlane.xlu0 %1551
      %v1553 = vsel %vm1408, %v1392, 0.0
      %1554 = vadd.xlane.f32.xlu0 %v1553
      %v1555 = vpop.xlane.xlu0 %1554
      %v1556 = vsel %vm1408, %v1393, 0.0
      %1557 = vadd.xlane.f32.xlu0 %v1556
      %v1558 = vpop.xlane.xlu0 %1557
      %v1559 = vsel %vm1408, %v1394, 0.0
      %1560 = vadd.xlane.f32.xlu0 %v1559
      %v1561 = vpop.xlane.xlu0 %1560
      %v1562 = vsel %vm1408, %v1395, 0.0
      %1563 = vadd.xlane.f32.xlu0 %v1562
      %v1564 = vpop.xlane.xlu0 %1563
      %v1565 = vsel %vm1408, %v1396, 0.0
      %1566 = vadd.xlane.f32.xlu0 %v1565
      %v1567 = vpop.xlane.xlu0 %1566
      %v1568 = vsel %vm1408, %v1397, 0.0
      %1569 = vadd.xlane.f32.xlu0 %v1568
      %v1570 = vpop.xlane.xlu0 %1569
      %v1571 = vsel %vm1408, %v1398, 0.0
      %1572 = vadd.xlane.f32.xlu0 %v1571
      %v1573 = vpop.xlane.xlu0 %1572
      %v1574 = vsel %vm1408, %v1399, 0.0
      %1575 = vadd.xlane.f32.xlu0 %v1574
      %v1576 = vpop.xlane.xlu0 %1575
      %v1577 = vsel %vm1408, %v1400, 0.0
      %1578 = vadd.xlane.f32.xlu0 %v1577
      %v1579 = vpop.xlane.xlu0 %1578
      %v1580 = vsel %vm1408, %v1401, 0.0
      %1581 = vadd.xlane.f32.xlu0 %v1580
      %v1582 = vpop.xlane.xlu0 %1581
      %v1583 = vsel %vm1408, %v1402, 0.0
      %1584 = vadd.xlane.f32.xlu0 %v1583
      %v1585 = vpop.xlane.xlu0 %1584
      %v1586 = vsel %vm1408, %v1403, 0.0
      %1587 = vadd.xlane.f32.xlu0 %v1586
      %v1588 = vpop.xlane.xlu0 %1587
      %v1589 = vsel %vm1408, %v1404, 0.0
      %1590 = vadd.xlane.f32.xlu0 %v1589
      %v1591 = vpop.xlane.xlu0 %1590
      %v1592 = vsel %vm1408, %v1405, 0.0
      %1593 = vadd.xlane.f32.xlu0 %v1592
      %v1594 = vpop.xlane.xlu0 %1593
      %v1595 = vsel %vm1408, %v1406, 0.0
      %1596 = vadd.xlane.f32.xlu0 %v1595
      %v1597 = vpop.xlane.xlu0 %1596
      %v1598 = vsel %vm1408, %v1407, 0.0
      %1599 = vadd.xlane.f32.xlu0 %v1598
      %v1600 = vpop.xlane.xlu0 %1599
      %v1601 = vrcp.pop %v1411
      %v1602 = vmul.f32 %v1344, %v1601
      %v1603 = vrcp.pop %v1414
      %v1604 = vmul.f32 %v1345, %v1603
      %v1605 = vrcp.pop %v1417
      %v1606 = vmul.f32 %v1346, %v1605
      %v1607 = vrcp.pop %v1420
      %v1608 = vmul.f32 %v1347, %v1607
      %v1609 = vrcp.pop %v1423
      %v1610 = vmul.f32 %v1348, %v1609
      %v1611 = vrcp.pop %v1426
      %v1612 = vmul.f32 %v1349, %v1611
      %v1613 = vrcp.pop %v1429
      %v1614 = vmul.f32 %v1350, %v1613
      %v1615 = vrcp.pop %v1432
      %v1616 = vmul.f32 %v1351, %v1615
      %v1617 = vrcp.pop %v1435
      %v1618 = vmul.f32 %v1352, %v1617
      %v1619 = vrcp.pop %v1438
      %v1620 = vmul.f32 %v1353, %v1619
      %v1621 = vrcp.pop %v1441
      %v1622 = vmul.f32 %v1354, %v1621
      %v1623 = vrcp.pop %v1444
      %v1624 = vmul.f32 %v1355, %v1623
      %v1625 = vrcp.pop %v1447
      %v1626 = vmul.f32 %v1356, %v1625
      %v1627 = vrcp.pop %v1450
      %v1628 = vmul.f32 %v1357, %v1627
      %v1629 = vrcp.pop %v1453
      %v1630 = vmul.f32 %v1358, %v1629
      %v1631 = vrcp.pop %v1456
      %v1632 = vmul.f32 %v1359, %v1631
      %v1633 = vrcp.pop %v1459
      %v1634 = vmul.f32 %v1360, %v1633
      %v1635 = vrcp.pop %v1462
      %v1636 = vmul.f32 %v1361, %v1635
      %v1637 = vrcp.pop %v1465
      %v1638 = vmul.f32 %v1362, %v1637
      %v1639 = vrcp.pop %v1468
      %v1640 = vmul.f32 %v1363, %v1639
      %v1641 = vrcp.pop %v1471
      %v1642 = vmul.f32 %v1364, %v1641
      %v1643 = vrcp.pop %v1474
      %v1644 = vmul.f32 %v1365, %v1643
      %v1645 = vrcp.pop %v1477
      %v1646 = vmul.f32 %v1366, %v1645
      %v1647 = vrcp.pop %v1480
      %v1648 = vmul.f32 %v1367, %v1647
      %v1649 = vrcp.pop %v1483
      %v1650 = vmul.f32 %v1368, %v1649
      %v1651 = vrcp.pop %v1486
      %v1652 = vmul.f32 %v1369, %v1651
      %v1653 = vrcp.pop %v1489
      %v1654 = vmul.f32 %v1370, %v1653
      %v1655 = vrcp.pop %v1492
      %v1656 = vmul.f32 %v1371, %v1655
      %v1657 = vrcp.pop %v1495
      %v1658 = vmul.f32 %v1372, %v1657
      %v1659 = vrcp.pop %v1498
      %v1660 = vmul.f32 %v1373, %v1659
      %v1661 = vrcp.pop %v1501
      %v1662 = vmul.f32 %v1374, %v1661
      %v1663 = vrcp.pop %v1504
      %v1664 = vmul.f32 %v1375, %v1663
      %v1665 = vrcp.pop %v1507
      %v1666 = vmul.f32 %v1376, %v1665
      %v1667 = vrcp.pop %v1510
      %v1668 = vmul.f32 %v1377, %v1667
      %v1669 = vrcp.pop %v1513
      %v1670 = vmul.f32 %v1378, %v1669
      %v1671 = vrcp.pop %v1516
      %v1672 = vmul.f32 %v1379, %v1671
      %v1673 = vrcp.pop %v1519
      %v1674 = vmul.f32 %v1380, %v1673
      %v1675 = vrcp.pop %v1522
      %v1676 = vmul.f32 %v1381, %v1675
      %v1677 = vrcp.pop %v1525
      %v1678 = vmul.f32 %v1382, %v1677
      %v1679 = vrcp.pop %v1528
      %v1680 = vmul.f32 %v1383, %v1679
      %v1681 = vrcp.pop %v1531
      %v1682 = vmul.f32 %v1384, %v1681
      %v1683 = vrcp.pop %v1534
      %v1684 = vmul.f32 %v1385, %v1683
      %v1685 = vrcp.pop %v1537
      %v1686 = vmul.f32 %v1386, %v1685
      %v1687 = vrcp.pop %v1540
      %v1688 = vmul.f32 %v1387, %v1687
      %v1689 = vrcp.pop %v1543
      %v1690 = vmul.f32 %v1388, %v1689
      %v1691 = vrcp.pop %v1546
      %v1692 = vmul.f32 %v1389, %v1691
      %v1693 = vrcp.pop %v1549
      %v1694 = vmul.f32 %v1390, %v1693
      %v1695 = vrcp.pop %v1552
      %v1696 = vmul.f32 %v1391, %v1695
      %v1697 = vrcp.pop %v1555
      %v1698 = vmul.f32 %v1392, %v1697
      %v1699 = vrcp.pop %v1558
      %v1700 = vmul.f32 %v1393, %v1699
      %v1701 = vrcp.pop %v1561
      %v1702 = vmul.f32 %v1394, %v1701
      %v1703 = vrcp.pop %v1564
      %v1704 = vmul.f32 %v1395, %v1703
      %v1705 = vrcp.pop %v1567
      %v1706 = vmul.f32 %v1396, %v1705
      %v1707 = vrcp.pop %v1570
      %v1708 = vmul.f32 %v1397, %v1707
      %v1709 = vrcp.pop %v1573
      %v1710 = vmul.f32 %v1398, %v1709
      %v1711 = vrcp.pop %v1576
      %v1712 = vmul.f32 %v1399, %v1711
      %v1713 = vrcp.pop %v1579
      %v1714 = vmul.f32 %v1400, %v1713
      %v1715 = vrcp.pop %v1582
      %v1716 = vmul.f32 %v1401, %v1715
      %v1717 = vrcp.pop %v1585
      %v1718 = vmul.f32 %v1402, %v1717
      %v1719 = vrcp.pop %v1588
      %v1720 = vmul.f32 %v1403, %v1719
      %v1721 = vrcp.pop %v1591
      %v1722 = vmul.f32 %v1404, %v1721
      %v1723 = vrcp.pop %v1594
      %v1724 = vmul.f32 %v1405, %v1723
      %v1725 = vrcp.pop %v1597
      %v1726 = vmul.f32 %v1406, %v1725
      %v1727 = vrcp.pop %v1600
      %v1728 = vmul.f32 %v1407, %v1727
      %1729 = vst.msk [vmem:[%s118] sm:$0xff] %vm1408, %v1602
      %1730 = vst.msk [vmem:[%s118 + $0x8] sm:$0xff] %vm1408, %v1604
      %1731 = vst.msk [vmem:[%s118 + $0x10] sm:$0xff] %vm1408, %v1606
      %1732 = vst.msk [vmem:[%s118 + $0x18] sm:$0xff] %vm1408, %v1608
      %1733 = vst.msk [vmem:[%s118 + $0x20] sm:$0xff] %vm1408, %v1610
      %1734 = vst.msk [vmem:[%s118 + $0x28] sm:$0xff] %vm1408, %v1612
      %1735 = vst.msk [vmem:[%s118 + $0x30] sm:$0xff] %vm1408, %v1614
      %1736 = vst.msk [vmem:[%s118 + $0x38] sm:$0xff] %vm1408, %v1616
      %1737 = vst.msk [vmem:[%s118 + $0x40] sm:$0xff] %vm1408, %v1618
      %1738 = vst.msk [vmem:[%s118 + $0x48] sm:$0xff] %vm1408, %v1620
      %1739 = vst.msk [vmem:[%s118 + $0x50] sm:$0xff] %vm1408, %v1622
      %1740 = vst.msk [vmem:[%s118 + $0x58] sm:$0xff] %vm1408, %v1624
      %1741 = vst.msk [vmem:[%s118 + $0x60] sm:$0xff] %vm1408, %v1626
      %1742 = vst.msk [vmem:[%s118 + $0x68] sm:$0xff] %vm1408, %v1628
      %1743 = vst.msk [vmem:[%s118 + $0x70] sm:$0xff] %vm1408, %v1630
      %1744 = vst.msk [vmem:[%s118 + $0x78] sm:$0xff] %vm1408, %v1632
      %1745 = vst.msk [vmem:[%s118 + $0x80] sm:$0xff] %vm1408, %v1634
      %1746 = vst.msk [vmem:[%s118 + $0x88] sm:$0xff] %vm1408, %v1636
      %1747 = vst.msk [vmem:[%s118 + $0x90] sm:$0xff] %vm1408, %v1638
      %1748 = vst.msk [vmem:[%s118 + $0x98] sm:$0xff] %vm1408, %v1640
      %1749 = vst.msk [vmem:[%s118 + $0xa0] sm:$0xff] %vm1408, %v1642
      %1750 = vst.msk [vmem:[%s118 + $0xa8] sm:$0xff] %vm1408, %v1644
      %1751 = vst.msk [vmem:[%s118 + $0xb0] sm:$0xff] %vm1408, %v1646
      %1752 = vst.msk [vmem:[%s118 + $0xb8] sm:$0xff] %vm1408, %v1648
      %1753 = vst.msk [vmem:[%s118 + $0xc0] sm:$0xff] %vm1408, %v1650
      %1754 = vst.msk [vmem:[%s118 + $0xc8] sm:$0xff] %vm1408, %v1652
      %1755 = vst.msk [vmem:[%s118 + $0xd0] sm:$0xff] %vm1408, %v1654
      %1756 = vst.msk [vmem:[%s118 + $0xd8] sm:$0xff] %vm1408, %v1656
      %1757 = vst.msk [vmem:[%s118 + $0xe0] sm:$0xff] %vm1408, %v1658
      %1758 = vst.msk [vmem:[%s118 + $0xe8] sm:$0xff] %vm1408, %v1660
      %1759 = vst.msk [vmem:[%s118 + $0xf0] sm:$0xff] %vm1408, %v1662
      %1760 = vst.msk [vmem:[%s118 + $0xf8] sm:$0xff] %vm1408, %v1664
      %1761 = vst.msk [vmem:[%s118 + $0x100] sm:$0xff] %vm1408, %v1666
      %1762 = vst.msk [vmem:[%s118 + $0x108] sm:$0xff] %vm1408, %v1668
      %1763 = vst.msk [vmem:[%s118 + $0x110] sm:$0xff] %vm1408, %v1670
      %1764 = vst.msk [vmem:[%s118 + $0x118] sm:$0xff] %vm1408, %v1672
      %1765 = vst.msk [vmem:[%s118 + $0x120] sm:$0xff] %vm1408, %v1674
      %1766 = vst.msk [vmem:[%s118 + $0x128] sm:$0xff] %vm1408, %v1676
      %1767 = vst.msk [vmem:[%s118 + $0x130] sm:$0xff] %vm1408, %v1678
      %1768 = vst.msk [vmem:[%s118 + $0x138] sm:$0xff] %vm1408, %v1680
      %1769 = vst.msk [vmem:[%s118 + $0x140] sm:$0xff] %vm1408, %v1682
      %1770 = vst.msk [vmem:[%s118 + $0x148] sm:$0xff] %vm1408, %v1684
      %1771 = vst.msk [vmem:[%s118 + $0x150] sm:$0xff] %vm1408, %v1686
      %1772 = vst.msk [vmem:[%s118 + $0x158] sm:$0xff] %vm1408, %v1688
      %1773 = vst.msk [vmem:[%s118 + $0x160] sm:$0xff] %vm1408, %v1690
      %1774 = vst.msk [vmem:[%s118 + $0x168] sm:$0xff] %vm1408, %v1692
      %1775 = vst.msk [vmem:[%s118 + $0x170] sm:$0xff] %vm1408, %v1694
      %1776 = vst.msk [vmem:[%s118 + $0x178] sm:$0xff] %vm1408, %v1696
      %1777 = vst.msk [vmem:[%s118 + $0x180] sm:$0xff] %vm1408, %v1698
      %1778 = vst.msk [vmem:[%s118 + $0x188] sm:$0xff] %vm1408, %v1700
      %1779 = vst.msk [vmem:[%s118 + $0x190] sm:$0xff] %vm1408, %v1702
      %1780 = vst.msk [vmem:[%s118 + $0x198] sm:$0xff] %vm1408, %v1704
      %1781 = vst.msk [vmem:[%s118 + $0x1a0] sm:$0xff] %vm1408, %v1706
      %1782 = vst.msk [vmem:[%s118 + $0x1a8] sm:$0xff] %vm1408, %v1708
      %1783 = vst.msk [vmem:[%s118 + $0x1b0] sm:$0xff] %vm1408, %v1710
      %1784 = vst.msk [vmem:[%s118 + $0x1b8] sm:$0xff] %vm1408, %v1712
      %1785 = vst.msk [vmem:[%s118 + $0x1c0] sm:$0xff] %vm1408, %v1714
      %1786 = vst.msk [vmem:[%s118 + $0x1c8] sm:$0xff] %vm1408, %v1716
      %1787 = vst.msk [vmem:[%s118 + $0x1d0] sm:$0xff] %vm1408, %v1718
      %1788 = vst.msk [vmem:[%s118 + $0x1d8] sm:$0xff] %vm1408, %v1720
      %1789 = vst.msk [vmem:[%s118 + $0x1e0] sm:$0xff] %vm1408, %v1722
      %1790 = vst.msk [vmem:[%s118 + $0x1e8] sm:$0xff] %vm1408, %v1724
      %1791 = vst.msk [vmem:[%s118 + $0x1f0] sm:$0xff] %vm1408, %v1726
      %1792 = vst.msk [vmem:[%s118 + $0x1f8] sm:$0xff] %vm1408, %v1728
      %s1793 = smul.u32 64, %s12
      %p1794 = scmp.lt.s32.totalorder %s1793, 255
      %s1795 = scalar_select %p1794, %s1793, 255
      %s1796 = smul.addr %s1795, 8
      %s1797 = scalar_lea.vmem %s1, %s1796
      // Predicated region
      $region25: #{tpu_custom_call.1} parent=23 // pred_check
        %p1798 = pneg %p56
      $region26: #{tpu_custom_call.1} parent=23 // pred_check_branch
        %1800 = sbr.rel (%p1798) target = $region28
      $region27: #{tpu_custom_call.1} parent=23 // pred_region
        %s1801 = smul.u32 64, %s12
      $region28: #{tpu_custom_call.1} parent=23 // pred_fallthru
        _
    $region24: #{tpu_custom_call.1} parent=5 // pred_fallthru
      _
    %p1802 = scmp.le.s32.totalorder 2, %s7
    // Predicated region
    $region29: #{tpu_custom_call.1} parent=5 // pred_check
      %p1803 = pneg %p1802
    $region30: #{tpu_custom_call.1} parent=5 // pred_check_branch
      %1805 = sbr.rel (%p1803) target = $region32
    $region31: #{tpu_custom_call.1} parent=5 // pred_region
      %s1806 = ssub.s32 %s7, 2
      // Predicated region
      $region33: #{tpu_custom_call.1} parent=31 // pred_check
        %p1807 = pneg %p62
      $region34: #{tpu_custom_call.1} parent=31 // pred_check_branch
        %1809 = sbr.rel (%p1807) target = $region36
      $region35: #{tpu_custom_call.1} parent=31 // pred_region
        %s1810 = smul.u32 64, %s13
        %p1811 = scmp.lt.s32.totalorder %s1810, 255
        %s1812 = scalar_select %p1811, %s1810, 255
        %s1813 = smul.addr %s1812, 8
        %s1814 = scalar_lea.vmem %s1, %s1813
      $region36: #{tpu_custom_call.1} parent=31 // pred_fallthru
        _
    $region32: #{tpu_custom_call.1} parent=5 // pred_fallthru
      _
  $region6: #{tpu_custom_call.1} parent=0 // loop_footer
    %s11 = sadd.s32 1, %s7
  $region7: #{tpu_custom_call.1} parent=0 // loop_footer_branch
    %6 = sbr.rel target = $region3
  $region8: #{tpu_custom_call.1} parent=0 // loop_exit
    _

</llo_original>
